<compile_context>
chip_gen: v6e
topology: v6e:2x2x1
jax: 0.10.0
libtpu: 0.0.40
codegen_flags: <defaults>
</compile_context>

<pallas_src>
import math
import functools

import jax
import jax.numpy as jnp
from jax.experimental import pallas as pl
from jax.experimental.pallas import tpu as pltpu


# ----------------------------------------------------------------------------
# Fused Pallas kernel (all LSTM layers + MLP head), batch row pre-sliced.
# ----------------------------------------------------------------------------

def _fused_kernel(*refs, T, H, num_layers):
    """Ref layout (inputs, then output, then scratch):

      x_ref                               (T, Fin)   time-major, single batch row
      per layer: wih_ref (Fin, 4H), whh_ref (H, 4H), b_ref (1, 4H)
      w1_ref (H, fc), b1_ref (1, fc), w2_ref (1, fc), b2_ref (1, 1)
      out_ref (T, 1)
      seq_scr (T, H)   per-layer hidden-state sequence (reused across layers)
    """
    x_ref = refs[0]
    off = 1
    layers = []
    for _ in range(num_layers):
        layers.append((refs[off], refs[off + 1], refs[off + 2]))
        off += 3
    w1_ref, b1_ref, w2_ref, b2_ref = refs[off:off + 4]
    out_ref = refs[off + 4]
    seq_scr = refs[off + 5]

    for li, (wih_ref, whh_ref, b_ref) in enumerate(layers):
        # Previous layer's full hidden sequence (or the raw input for layer 0).
        inp = x_ref[...] if li == 0 else seq_scr[...]              # (T, Fin)

        # Hoisted input projection + bias: one MXU matmul outside the serial
        # recurrence.  Only h @ W_hh remains on the per-timestep path.
        gates_x = (jnp.dot(inp, wih_ref[...],
                           preferred_element_type=jnp.float32)
                   + b_ref[...])                                   # (T, 4H)

        whh = whh_ref[...]                                         # hoisted (H, 4H)
        h = jnp.zeros((1, H), jnp.float32)
        c = jnp.zeros((1, H), jnp.float32)

        for t in range(T):                                         # static unroll
            gates = (gates_x[t:t + 1, :]
                     + jnp.dot(h, whh,
                               preferred_element_type=jnp.float32))  # (1, 4H)
            # Gate layout after init-time column permutation: [i | f | o | g]
            sig = jax.nn.sigmoid(gates[:, :3 * H])                 # i, f, o together
            g = jnp.tanh(gates[:, 3 * H:])
            c = sig[:, H:2 * H] * c + sig[:, :H] * g
            h = sig[:, 2 * H:3 * H] * jnp.tanh(c)
            # Overwrite this layer's hidden sequence row (read happened above).
            seq_scr[pl.ds(t, 1), :] = h

    # MLP head on y[:, -1, :]  (eval mode: dropout = identity)
    y_last = seq_scr[...]                                          # (T, H)
    hdd = jnp.maximum(
        jnp.dot(y_last, w1_ref[...], preferred_element_type=jnp.float32)
        + b1_ref[...], 0.0)                                        # (T, fc)
    # (fc -> 1) projection as a VPU multiply + lane reduce (no N=1 matmul).
    out_ref[...] = (jnp.sum(hdd * w2_ref[...], axis=-1, keepdims=True)
                    + b2_ref[...])                                 # (T, 1)


# ----------------------------------------------------------------------------
# Wrapper
# ----------------------------------------------------------------------------

@jax.jit
def simple_lstm_forward(x, params):
    """Replicates Simple_LSTM.forward (eval mode). x: (T, B, F) -> (T, 1)."""
    T, B, F = x.shape
    num_layers = len(params["lstm"])
    H = params["lstm"][0][1].shape[0]

    # Only batch row B-1 ever reaches the output (y[:, -1, :]); LSTM batch
    # rows are independent, so the other rows are dead and eliminated here.
    x_last = x[:, B - 1, :].astype(jnp.float32)                    # (T, F)

    kernel = functools.partial(_fused_kernel, T=T, H=H, num_layers=num_layers)

    args = [x_last]
    for (wih_t, whh_t, b) in params["lstm"]:
        args += [wih_t, whh_t, b]
    args += [params["w1_t"], params["b1"], params["w2_row"], params["b2"]]

    return pl.pallas_call(
        kernel,
        out_shape=jax.ShapeDtypeStruct((T, 1), jnp.float32),
        scratch_shapes=[
            pltpu.VMEM((T, H), jnp.float32),   # inter-layer hidden sequence
        ],
    )(*args)


# ----------------------------------------------------------------------------
# Deterministic parameter init (PyTorch-style uniform(-1/sqrt(H), 1/sqrt(H))).
# Gate columns are permuted from torch's (i, f, g, o) to (i, f, o, g) so the
# kernel can apply one contiguous sigmoid.  When loading a real PyTorch
# checkpoint, apply the same permutation.
# ----------------------------------------------------------------------------

def init_params(key, feature_num, hidden_dim, num_layers, fc_layer_dim):
    H = hidden_dim
    keys = jax.random.split(key, 4 * num_layers + 4)
    ki = iter(keys)
    bound_lstm = 1.0 / math.sqrt(H)

    # torch rows: [i(0:H), f(H:2H), g(2H:3H), o(3H:4H)] -> kernel: [i, f, o, g]
    perm = jnp.concatenate([jnp.arange(0, H), jnp.arange(H, 2 * H),
                            jnp.arange(3 * H, 4 * H), jnp.arange(2 * H, 3 * H)])

    lstm_params = []
    for layer in range(num_layers):
        in_dim = feature_num if layer == 0 else H
        w_ih = jax.random.uniform(next(ki), (4 * H, in_dim),
                                  minval=-bound_lstm, maxval=bound_lstm)
        w_hh = jax.random.uniform(next(ki), (4 * H, H),
                                  minval=-bound_lstm, maxval=bound_lstm)
        b_ih = jax.random.uniform(next(ki), (4 * H,),
                                  minval=-bound_lstm, maxval=bound_lstm)
        b_hh = jax.random.uniform(next(ki), (4 * H,),
                                  minval=-bound_lstm, maxval=bound_lstm)
        lstm_params.append((
            w_ih[perm, :].T.astype(jnp.float32),                        # (Fin, 4H)
            w_hh[perm, :].T.astype(jnp.float32),                        # (H,   4H)
            (b_ih + b_hh)[perm].reshape(1, -1).astype(jnp.float32),     # (1,   4H)
        ))

    bound1 = 1.0 / math.sqrt(H)
    w1 = jax.random.uniform(next(ki), (fc_layer_dim, H),
                            minval=-bound1, maxval=bound1)
    b1 = jax.random.uniform(next(ki), (fc_layer_dim,),
                            minval=-bound1, maxval=bound1)
    bound2 = 1.0 / math.sqrt(fc_layer_dim)
    w2 = jax.random.uniform(next(ki), (1, fc_layer_dim),
                            minval=-bound2, maxval=bound2)
    b2 = jax.random.uniform(next(ki), (1,), minval=-bound2, maxval=bound2)

    return {
        "lstm": lstm_params,
        "w1_t": w1.T.astype(jnp.float32),                 # (H, fc)
        "b1": b1.reshape(1, -1).astype(jnp.float32),      # (1, fc)
        "w2_row": w2.astype(jnp.float32),                 # (1, fc)
        "b2": b2.reshape(1, 1).astype(jnp.float32),       # (1, 1)
    }


# ----------------------------------------------------------------------------
# Pure-JAX reference: FULL-batch LSTM (same permuted gate layout), then the
# y[:, -1, :] slice and the head — validates the dead-batch-row elimination.
# ----------------------------------------------------------------------------

def reference_forward(x, params):
    y = x.astype(jnp.float32)
    for (w_ih_t, w_hh_t, b) in params["lstm"]:
        T, B, _ = y.shape
        H = w_hh_t.shape[0]
        h = jnp.zeros((B, H), jnp.float32)
        c = jnp.zeros((B, H), jnp.float32)
        outs = []
        for t in range(T):
            gates = y[t] @ w_ih_t + h @ w_hh_t + b
            i = jax.nn.sigmoid(gates[:, 0 * H:1 * H])
            f = jax.nn.sigmoid(gates[:, 1 * H:2 * H])
            o = jax.nn.sigmoid(gates[:, 2 * H:3 * H])
            g = jnp.tanh(gates[:, 3 * H:4 * H])
            c = f * c + i * g
            h = o * jnp.tanh(c)
            outs.append(h)
        y = jnp.stack(outs, axis=0)
    y_last = y[:, -1, :]
    hdd = jnp.maximum(y_last @ params["w1_t"] + params["b1"], 0.0)
    return hdd @ params["w2_row"].T + params["b2"]


# ----------------------------------------------------------------------------
# Main
# ----------------------------------------------------------------------------

if __name__ == "__main__":
    # Module hyperparameters (small, consistent with the forward pass)
    feature_num = 8
    sequence_len = 8          # T
    hidden_dim = 32           # H
    lstm_num_layers = 2
    fc_layer_dim = 16
    batch = 2                 # B

    key = jax.random.PRNGKey(0)
    k_x, k_p = jax.random.split(key)

    # Input (time-major, as nn.LSTM with batch_first=False expects)
    x = jax.random.normal(k_x, (sequence_len, batch, feature_num),
                          dtype=jnp.float32)

    params = init_params(k_p, feature_num, hidden_dim,
                         lstm_num_layers, fc_layer_dim)

    out = simple_lstm_forward(x, params)
    out = jax.block_until_ready(out)

    ref = reference_forward(x, params)
    assert out.shape == (sequence_len, 1), out.shape
    assert jnp.allclose(out, ref, atol=1e-4, rtol=1e-4), (
        float(jnp.max(jnp.abs(out - ref))))

    print("KERNEL_OK")
</pallas_src>

<mosaic_0001>
module attributes {stable_mosaic.version = 11 : i64} {
  func.func @_fused_kernel(%arg0: memref<8x8xf32, #tpu.memory_space<vmem>>, %arg1: memref<8x128xf32, #tpu.memory_space<vmem>>, %arg2: memref<32x128xf32, #tpu.memory_space<vmem>>, %arg3: memref<1x128xf32, #tpu.memory_space<vmem>>, %arg4: memref<32x128xf32, #tpu.memory_space<vmem>>, %arg5: memref<32x128xf32, #tpu.memory_space<vmem>>, %arg6: memref<1x128xf32, #tpu.memory_space<vmem>>, %arg7: memref<32x16xf32, #tpu.memory_space<vmem>>, %arg8: memref<1x16xf32, #tpu.memory_space<vmem>>, %arg9: memref<1x16xf32, #tpu.memory_space<vmem>>, %arg10: memref<1x1xf32, #tpu.memory_space<vmem>>, %arg11: memref<8x1xf32, #tpu.memory_space<vmem>>, %arg12: memref<8x32xf32, #tpu.memory_space<vmem>>) attributes {dimension_semantics = [], scalar_prefetch = 0 : i64, scratch_operands = 1 : i64, tpu.core_type = #tpu.core_type<tc>} {
    %c0 = arith.constant 0 : index
    %c0_0 = arith.constant 0 : index
    %0 = vector.load %arg0[%c0, %c0_0] : memref<8x8xf32, #tpu.memory_space<vmem>>, vector<8x8xf32>
    %c0_1 = arith.constant 0 : index
    %c0_2 = arith.constant 0 : index
    %1 = vector.load %arg1[%c0_1, %c0_2] : memref<8x128xf32, #tpu.memory_space<vmem>>, vector<8x128xf32>
    %cst = arith.constant dense<0.000000e+00> : vector<8x128xf32>
    %2 = tpu.matmul %0, %1, %cst {dimension_numbers = #tpu.dot_dimension_numbers<[1], [0], [0], [1], [0, 0, 1, 1], [], []>} : vector<8x8xf32>, vector<8x128xf32>, vector<8x128xf32> -> vector<8x128xf32>
    %c0_3 = arith.constant 0 : index
    %c0_4 = arith.constant 0 : index
    %3 = vector.load %arg3[%c0_3, %c0_4] : memref<1x128xf32, #tpu.memory_space<vmem>>, vector<1x128xf32>
    %4 = vector.broadcast %3 : vector<1x128xf32> to vector<8x128xf32>
    %5 = arith.addf %2, %4 : vector<8x128xf32>
    %c0_5 = arith.constant 0 : index
    %c0_6 = arith.constant 0 : index
    %6 = vector.load %arg2[%c0_5, %c0_6] : memref<32x128xf32, #tpu.memory_space<vmem>>, vector<32x128xf32>
    %cst_7 = arith.constant 0.000000e+00 : f32
    %7 = vector.broadcast %cst_7 : f32 to vector<1x32xf32>
    %cst_8 = arith.constant 0.000000e+00 : f32
    %8 = vector.broadcast %cst_8 : f32 to vector<1x32xf32>
    %9 = vector.extract_strided_slice %5 {offsets = [0, 0], sizes = [1, 128], strides = [1, 1]} : vector<8x128xf32> to vector<1x128xf32>
    %cst_9 = arith.constant dense<0.000000e+00> : vector<1x128xf32>
    %10 = tpu.matmul %7, %6, %cst_9 {dimension_numbers = #tpu.dot_dimension_numbers<[1], [0], [0], [1], [0, 0, 1, 1], [], []>} : vector<1x32xf32>, vector<32x128xf32>, vector<1x128xf32> -> vector<1x128xf32>
    %11 = arith.addf %9, %10 : vector<1x128xf32>
    %12 = vector.extract_strided_slice %11 {offsets = [0, 0], sizes = [1, 96], strides = [1, 1]} : vector<1x128xf32> to vector<1x96xf32>
    %13 = arith.negf %12 : vector<1x96xf32>
    %14 = math.exp %13 : vector<1x96xf32>
    %cst_10 = arith.constant 1.000000e+00 : f32
    %15 = vector.broadcast %cst_10 : f32 to vector<1x96xf32>
    %16 = arith.addf %15, %14 : vector<1x96xf32>
    %17 = arith.divf %15, %16 : vector<1x96xf32>
    %18 = vector.extract_strided_slice %11 {offsets = [0, 96], sizes = [1, 32], strides = [1, 1]} : vector<1x128xf32> to vector<1x32xf32>
    %19 = math.tanh %18 : vector<1x32xf32>
    %20 = vector.extract_strided_slice %17 {offsets = [0, 32], sizes = [1, 32], strides = [1, 1]} : vector<1x96xf32> to vector<1x32xf32>
    %21 = arith.mulf %20, %8 : vector<1x32xf32>
    %22 = vector.extract_strided_slice %17 {offsets = [0, 0], sizes = [1, 32], strides = [1, 1]} : vector<1x96xf32> to vector<1x32xf32>
    %23 = arith.mulf %22, %19 : vector<1x32xf32>
    %24 = arith.addf %21, %23 : vector<1x32xf32>
    %25 = vector.extract_strided_slice %17 {offsets = [0, 64], sizes = [1, 32], strides = [1, 1]} : vector<1x96xf32> to vector<1x32xf32>
    %26 = math.tanh %24 : vector<1x32xf32>
    %27 = arith.mulf %25, %26 : vector<1x32xf32>
    %c0_11 = arith.constant 0 : index
    %c0_12 = arith.constant 0 : index
    %28 = vector.load %arg12[%c0_11, %c0_12] : memref<8x32xf32, #tpu.memory_space<vmem>>, vector<1x32xf32>
    tpu.vector_store %arg12[%c0_11, %c0_12], %27 {strides = array<i32>} : memref<8x32xf32, #tpu.memory_space<vmem>>, vector<1x32xf32>,
    %29 = vector.extract_strided_slice %5 {offsets = [1, 0], sizes = [1, 128], strides = [1, 1]} : vector<8x128xf32> to vector<1x128xf32>
    %cst_13 = arith.constant dense<0.000000e+00> : vector<1x128xf32>
    %30 = tpu.matmul %27, %6, %cst_13 {dimension_numbers = #tpu.dot_dimension_numbers<[1], [0], [0], [1], [0, 0, 1, 1], [], []>} : vector<1x32xf32>, vector<32x128xf32>, vector<1x128xf32> -> vector<1x128xf32>
    %31 = arith.addf %29, %30 : vector<1x128xf32>
    %32 = vector.extract_strided_slice %31 {offsets = [0, 0], sizes = [1, 96], strides = [1, 1]} : vector<1x128xf32> to vector<1x96xf32>
    %33 = arith.negf %32 : vector<1x96xf32>
    %34 = math.exp %33 : vector<1x96xf32>
    %cst_14 = arith.constant 1.000000e+00 : f32
    %35 = vector.broadcast %cst_14 : f32 to vector<1x96xf32>
    %36 = arith.addf %35, %34 : vector<1x96xf32>
    %37 = arith.divf %35, %36 : vector<1x96xf32>
    %38 = vector.extract_strided_slice %31 {offsets = [0, 96], sizes = [1, 32], strides = [1, 1]} : vector<1x128xf32> to vector<1x32xf32>
    %39 = math.tanh %38 : vector<1x32xf32>
    %40 = vector.extract_strided_slice %37 {offsets = [0, 32], sizes = [1, 32], strides = [1, 1]} : vector<1x96xf32> to vector<1x32xf32>
    %41 = arith.mulf %40, %24 : vector<1x32xf32>
    %42 = vector.extract_strided_slice %37 {offsets = [0, 0], sizes = [1, 32], strides = [1, 1]} : vector<1x96xf32> to vector<1x32xf32>
    %43 = arith.mulf %42, %39 : vector<1x32xf32>
    %44 = arith.addf %41, %43 : vector<1x32xf32>
    %45 = vector.extract_strided_slice %37 {offsets = [0, 64], sizes = [1, 32], strides = [1, 1]} : vector<1x96xf32> to vector<1x32xf32>
    %46 = math.tanh %44 : vector<1x32xf32>
    %47 = arith.mulf %45, %46 : vector<1x32xf32>
    %c1 = arith.constant 1 : index
    %c0_15 = arith.constant 0 : index
    %48 = vector.load %arg12[%c1, %c0_15] : memref<8x32xf32, #tpu.memory_space<vmem>>, vector<1x32xf32>
    tpu.vector_store %arg12[%c1, %c0_15], %47 {strides = array<i32>} : memref<8x32xf32, #tpu.memory_space<vmem>>, vector<1x32xf32>,
    %49 = vector.extract_strided_slice %5 {offsets = [2, 0], sizes = [1, 128], strides = [1, 1]} : vector<8x128xf32> to vector<1x128xf32>
    %cst_16 = arith.constant dense<0.000000e+00> : vector<1x128xf32>
    %50 = tpu.matmul %47, %6, %cst_16 {dimension_numbers = #tpu.dot_dimension_numbers<[1], [0], [0], [1], [0, 0, 1, 1], [], []>} : vector<1x32xf32>, vector<32x128xf32>, vector<1x128xf32> -> vector<1x128xf32>
    %51 = arith.addf %49, %50 : vector<1x128xf32>
    %52 = vector.extract_strided_slice %51 {offsets = [0, 0], sizes = [1, 96], strides = [1, 1]} : vector<1x128xf32> to vector<1x96xf32>
    %53 = arith.negf %52 : vector<1x96xf32>
    %54 = math.exp %53 : vector<1x96xf32>
    %cst_17 = arith.constant 1.000000e+00 : f32
    %55 = vector.broadcast %cst_17 : f32 to vector<1x96xf32>
    %56 = arith.addf %55, %54 : vector<1x96xf32>
    %57 = arith.divf %55, %56 : vector<1x96xf32>
    %58 = vector.extract_strided_slice %51 {offsets = [0, 96], sizes = [1, 32], strides = [1, 1]} : vector<1x128xf32> to vector<1x32xf32>
    %59 = math.tanh %58 : vector<1x32xf32>
    %60 = vector.extract_strided_slice %57 {offsets = [0, 32], sizes = [1, 32], strides = [1, 1]} : vector<1x96xf32> to vector<1x32xf32>
    %61 = arith.mulf %60, %44 : vector<1x32xf32>
    %62 = vector.extract_strided_slice %57 {offsets = [0, 0], sizes = [1, 32], strides = [1, 1]} : vector<1x96xf32> to vector<1x32xf32>
    %63 = arith.mulf %62, %59 : vector<1x32xf32>
    %64 = arith.addf %61, %63 : vector<1x32xf32>
    %65 = vector.extract_strided_slice %57 {offsets = [0, 64], sizes = [1, 32], strides = [1, 1]} : vector<1x96xf32> to vector<1x32xf32>
    %66 = math.tanh %64 : vector<1x32xf32>
    %67 = arith.mulf %65, %66 : vector<1x32xf32>
    %c2 = arith.constant 2 : index
    %c0_18 = arith.constant 0 : index
    %68 = vector.load %arg12[%c2, %c0_18] : memref<8x32xf32, #tpu.memory_space<vmem>>, vector<1x32xf32>
    tpu.vector_store %arg12[%c2, %c0_18], %67 {strides = array<i32>} : memref<8x32xf32, #tpu.memory_space<vmem>>, vector<1x32xf32>,
    %69 = vector.extract_strided_slice %5 {offsets = [3, 0], sizes = [1, 128], strides = [1, 1]} : vector<8x128xf32> to vector<1x128xf32>
    %cst_19 = arith.constant dense<0.000000e+00> : vector<1x128xf32>
    %70 = tpu.matmul %67, %6, %cst_19 {dimension_numbers = #tpu.dot_dimension_numbers<[1], [0], [0], [1], [0, 0, 1, 1], [], []>} : vector<1x32xf32>, vector<32x128xf32>, vector<1x128xf32> -> vector<1x128xf32>
    %71 = arith.addf %69, %70 : vector<1x128xf32>
    %72 = vector.extract_strided_slice %71 {offsets = [0, 0], sizes = [1, 96], strides = [1, 1]} : vector<1x128xf32> to vector<1x96xf32>
    %73 = arith.negf %72 : vector<1x96xf32>
    %74 = math.exp %73 : vector<1x96xf32>
    %cst_20 = arith.constant 1.000000e+00 : f32
    %75 = vector.broadcast %cst_20 : f32 to vector<1x96xf32>
    %76 = arith.addf %75, %74 : vector<1x96xf32>
    %77 = arith.divf %75, %76 : vector<1x96xf32>
    %78 = vector.extract_strided_slice %71 {offsets = [0, 96], sizes = [1, 32], strides = [1, 1]} : vector<1x128xf32> to vector<1x32xf32>
    %79 = math.tanh %78 : vector<1x32xf32>
    %80 = vector.extract_strided_slice %77 {offsets = [0, 32], sizes = [1, 32], strides = [1, 1]} : vector<1x96xf32> to vector<1x32xf32>
    %81 = arith.mulf %80, %64 : vector<1x32xf32>
    %82 = vector.extract_strided_slice %77 {offsets = [0, 0], sizes = [1, 32], strides = [1, 1]} : vector<1x96xf32> to vector<1x32xf32>
    %83 = arith.mulf %82, %79 : vector<1x32xf32>
    %84 = arith.addf %81, %83 : vector<1x32xf32>
    %85 = vector.extract_strided_slice %77 {offsets = [0, 64], sizes = [1, 32], strides = [1, 1]} : vector<1x96xf32> to vector<1x32xf32>
    %86 = math.tanh %84 : vector<1x32xf32>
    %87 = arith.mulf %85, %86 : vector<1x32xf32>
    %c3 = arith.constant 3 : index
    %c0_21 = arith.constant 0 : index
    %88 = vector.load %arg12[%c3, %c0_21] : memref<8x32xf32, #tpu.memory_space<vmem>>, vector<1x32xf32>
    tpu.vector_store %arg12[%c3, %c0_21], %87 {strides = array<i32>} : memref<8x32xf32, #tpu.memory_space<vmem>>, vector<1x32xf32>,
    %89 = vector.extract_strided_slice %5 {offsets = [4, 0], sizes = [1, 128], strides = [1, 1]} : vector<8x128xf32> to vector<1x128xf32>
    %cst_22 = arith.constant dense<0.000000e+00> : vector<1x128xf32>
    %90 = tpu.matmul %87, %6, %cst_22 {dimension_numbers = #tpu.dot_dimension_numbers<[1], [0], [0], [1], [0, 0, 1, 1], [], []>} : vector<1x32xf32>, vector<32x128xf32>, vector<1x128xf32> -> vector<1x128xf32>
    %91 = arith.addf %89, %90 : vector<1x128xf32>
    %92 = vector.extract_strided_slice %91 {offsets = [0, 0], sizes = [1, 96], strides = [1, 1]} : vector<1x128xf32> to vector<1x96xf32>
    %93 = arith.negf %92 : vector<1x96xf32>
    %94 = math.exp %93 : vector<1x96xf32>
    %cst_23 = arith.constant 1.000000e+00 : f32
    %95 = vector.broadcast %cst_23 : f32 to vector<1x96xf32>
    %96 = arith.addf %95, %94 : vector<1x96xf32>
    %97 = arith.divf %95, %96 : vector<1x96xf32>
    %98 = vector.extract_strided_slice %91 {offsets = [0, 96], sizes = [1, 32], strides = [1, 1]} : vector<1x128xf32> to vector<1x32xf32>
    %99 = math.tanh %98 : vector<1x32xf32>
    %100 = vector.extract_strided_slice %97 {offsets = [0, 32], sizes = [1, 32], strides = [1, 1]} : vector<1x96xf32> to vector<1x32xf32>
    %101 = arith.mulf %100, %84 : vector<1x32xf32>
    %102 = vector.extract_strided_slice %97 {offsets = [0, 0], sizes = [1, 32], strides = [1, 1]} : vector<1x96xf32> to vector<1x32xf32>
    %103 = arith.mulf %102, %99 : vector<1x32xf32>
    %104 = arith.addf %101, %103 : vector<1x32xf32>
    %105 = vector.extract_strided_slice %97 {offsets = [0, 64], sizes = [1, 32], strides = [1, 1]} : vector<1x96xf32> to vector<1x32xf32>
    %106 = math.tanh %104 : vector<1x32xf32>
    %107 = arith.mulf %105, %106 : vector<1x32xf32>
    %c4 = arith.constant 4 : index
    %c0_24 = arith.constant 0 : index
    %108 = vector.load %arg12[%c4, %c0_24] : memref<8x32xf32, #tpu.memory_space<vmem>>, vector<1x32xf32>
    tpu.vector_store %arg12[%c4, %c0_24], %107 {strides = array<i32>} : memref<8x32xf32, #tpu.memory_space<vmem>>, vector<1x32xf32>,
    %109 = vector.extract_strided_slice %5 {offsets = [5, 0], sizes = [1, 128], strides = [1, 1]} : vector<8x128xf32> to vector<1x128xf32>
    %cst_25 = arith.constant dense<0.000000e+00> : vector<1x128xf32>
    %110 = tpu.matmul %107, %6, %cst_25 {dimension_numbers = #tpu.dot_dimension_numbers<[1], [0], [0], [1], [0, 0, 1, 1], [], []>} : vector<1x32xf32>, vector<32x128xf32>, vector<1x128xf32> -> vector<1x128xf32>
    %111 = arith.addf %109, %110 : vector<1x128xf32>
    %112 = vector.extract_strided_slice %111 {offsets = [0, 0], sizes = [1, 96], strides = [1, 1]} : vector<1x128xf32> to vector<1x96xf32>
    %113 = arith.negf %112 : vector<1x96xf32>
    %114 = math.exp %113 : vector<1x96xf32>
    %cst_26 = arith.constant 1.000000e+00 : f32
    %115 = vector.broadcast %cst_26 : f32 to vector<1x96xf32>
    %116 = arith.addf %115, %114 : vector<1x96xf32>
    %117 = arith.divf %115, %116 : vector<1x96xf32>
    %118 = vector.extract_strided_slice %111 {offsets = [0, 96], sizes = [1, 32], strides = [1, 1]} : vector<1x128xf32> to vector<1x32xf32>
    %119 = math.tanh %118 : vector<1x32xf32>
    %120 = vector.extract_strided_slice %117 {offsets = [0, 32], sizes = [1, 32], strides = [1, 1]} : vector<1x96xf32> to vector<1x32xf32>
    %121 = arith.mulf %120, %104 : vector<1x32xf32>
    %122 = vector.extract_strided_slice %117 {offsets = [0, 0], sizes = [1, 32], strides = [1, 1]} : vector<1x96xf32> to vector<1x32xf32>
    %123 = arith.mulf %122, %119 : vector<1x32xf32>
    %124 = arith.addf %121, %123 : vector<1x32xf32>
    %125 = vector.extract_strided_slice %117 {offsets = [0, 64], sizes = [1, 32], strides = [1, 1]} : vector<1x96xf32> to vector<1x32xf32>
    %126 = math.tanh %124 : vector<1x32xf32>
    %127 = arith.mulf %125, %126 : vector<1x32xf32>
    %c5 = arith.constant 5 : index
    %c0_27 = arith.constant 0 : index
    %128 = vector.load %arg12[%c5, %c0_27] : memref<8x32xf32, #tpu.memory_space<vmem>>, vector<1x32xf32>
    tpu.vector_store %arg12[%c5, %c0_27], %127 {strides = array<i32>} : memref<8x32xf32, #tpu.memory_space<vmem>>, vector<1x32xf32>,
    %129 = vector.extract_strided_slice %5 {offsets = [6, 0], sizes = [1, 128], strides = [1, 1]} : vector<8x128xf32> to vector<1x128xf32>
    %cst_28 = arith.constant dense<0.000000e+00> : vector<1x128xf32>
    %130 = tpu.matmul %127, %6, %cst_28 {dimension_numbers = #tpu.dot_dimension_numbers<[1], [0], [0], [1], [0, 0, 1, 1], [], []>} : vector<1x32xf32>, vector<32x128xf32>, vector<1x128xf32> -> vector<1x128xf32>
    %131 = arith.addf %129, %130 : vector<1x128xf32>
    %132 = vector.extract_strided_slice %131 {offsets = [0, 0], sizes = [1, 96], strides = [1, 1]} : vector<1x128xf32> to vector<1x96xf32>
    %133 = arith.negf %132 : vector<1x96xf32>
    %134 = math.exp %133 : vector<1x96xf32>
    %cst_29 = arith.constant 1.000000e+00 : f32
    %135 = vector.broadcast %cst_29 : f32 to vector<1x96xf32>
    %136 = arith.addf %135, %134 : vector<1x96xf32>
    %137 = arith.divf %135, %136 : vector<1x96xf32>
    %138 = vector.extract_strided_slice %131 {offsets = [0, 96], sizes = [1, 32], strides = [1, 1]} : vector<1x128xf32> to vector<1x32xf32>
    %139 = math.tanh %138 : vector<1x32xf32>
    %140 = vector.extract_strided_slice %137 {offsets = [0, 32], sizes = [1, 32], strides = [1, 1]} : vector<1x96xf32> to vector<1x32xf32>
    %141 = arith.mulf %140, %124 : vector<1x32xf32>
    %142 = vector.extract_strided_slice %137 {offsets = [0, 0], sizes = [1, 32], strides = [1, 1]} : vector<1x96xf32> to vector<1x32xf32>
    %143 = arith.mulf %142, %139 : vector<1x32xf32>
    %144 = arith.addf %141, %143 : vector<1x32xf32>
    %145 = vector.extract_strided_slice %137 {offsets = [0, 64], sizes = [1, 32], strides = [1, 1]} : vector<1x96xf32> to vector<1x32xf32>
    %146 = math.tanh %144 : vector<1x32xf32>
    %147 = arith.mulf %145, %146 : vector<1x32xf32>
    %c6 = arith.constant 6 : index
    %c0_30 = arith.constant 0 : index
    %148 = vector.load %arg12[%c6, %c0_30] : memref<8x32xf32, #tpu.memory_space<vmem>>, vector<1x32xf32>
    tpu.vector_store %arg12[%c6, %c0_30], %147 {strides = array<i32>} : memref<8x32xf32, #tpu.memory_space<vmem>>, vector<1x32xf32>,
    %149 = vector.extract_strided_slice %5 {offsets = [7, 0], sizes = [1, 128], strides = [1, 1]} : vector<8x128xf32> to vector<1x128xf32>
    %cst_31 = arith.constant dense<0.000000e+00> : vector<1x128xf32>
    %150 = tpu.matmul %147, %6, %cst_31 {dimension_numbers = #tpu.dot_dimension_numbers<[1], [0], [0], [1], [0, 0, 1, 1], [], []>} : vector<1x32xf32>, vector<32x128xf32>, vector<1x128xf32> -> vector<1x128xf32>
    %151 = arith.addf %149, %150 : vector<1x128xf32>
    %152 = vector.extract_strided_slice %151 {offsets = [0, 0], sizes = [1, 96], strides = [1, 1]} : vector<1x128xf32> to vector<1x96xf32>
    %153 = arith.negf %152 : vector<1x96xf32>
    %154 = math.exp %153 : vector<1x96xf32>
    %cst_32 = arith.constant 1.000000e+00 : f32
    %155 = vector.broadcast %cst_32 : f32 to vector<1x96xf32>
    %156 = arith.addf %155, %154 : vector<1x96xf32>
    %157 = arith.divf %155, %156 : vector<1x96xf32>
    %158 = vector.extract_strided_slice %151 {offsets = [0, 96], sizes = [1, 32], strides = [1, 1]} : vector<1x128xf32> to vector<1x32xf32>
    %159 = math.tanh %158 : vector<1x32xf32>
    %160 = vector.extract_strided_slice %157 {offsets = [0, 32], sizes = [1, 32], strides = [1, 1]} : vector<1x96xf32> to vector<1x32xf32>
    %161 = arith.mulf %160, %144 : vector<1x32xf32>
    %162 = vector.extract_strided_slice %157 {offsets = [0, 0], sizes = [1, 32], strides = [1, 1]} : vector<1x96xf32> to vector<1x32xf32>
    %163 = arith.mulf %162, %159 : vector<1x32xf32>
    %164 = arith.addf %161, %163 : vector<1x32xf32>
    %165 = vector.extract_strided_slice %157 {offsets = [0, 64], sizes = [1, 32], strides = [1, 1]} : vector<1x96xf32> to vector<1x32xf32>
    %166 = math.tanh %164 : vector<1x32xf32>
    %167 = arith.mulf %165, %166 : vector<1x32xf32>
    %c7 = arith.constant 7 : index
    %c0_33 = arith.constant 0 : index
    %168 = vector.load %arg12[%c7, %c0_33] : memref<8x32xf32, #tpu.memory_space<vmem>>, vector<1x32xf32>
    tpu.vector_store %arg12[%c7, %c0_33], %167 {strides = array<i32>} : memref<8x32xf32, #tpu.memory_space<vmem>>, vector<1x32xf32>,
    %c0_34 = arith.constant 0 : index
    %c0_35 = arith.constant 0 : index
    %169 = vector.load %arg12[%c0_34, %c0_35] : memref<8x32xf32, #tpu.memory_space<vmem>>, vector<8x32xf32>
    %c0_36 = arith.constant 0 : index
    %c0_37 = arith.constant 0 : index
    %170 = vector.load %arg4[%c0_36, %c0_37] : memref<32x128xf32, #tpu.memory_space<vmem>>, vector<32x128xf32>
    %cst_38 = arith.constant dense<0.000000e+00> : vector<8x128xf32>
    %171 = tpu.matmul %169, %170, %cst_38 {dimension_numbers = #tpu.dot_dimension_numbers<[1], [0], [0], [1], [0, 0, 1, 1], [], []>} : vector<8x32xf32>, vector<32x128xf32>, vector<8x128xf32> -> vector<8x128xf32>
    %c0_39 = arith.constant 0 : index
    %c0_40 = arith.constant 0 : index
    %172 = vector.load %arg6[%c0_39, %c0_40] : memref<1x128xf32, #tpu.memory_space<vmem>>, vector<1x128xf32>
    %173 = vector.broadcast %172 : vector<1x128xf32> to vector<8x128xf32>
    %174 = arith.addf %171, %173 : vector<8x128xf32>
    %c0_41 = arith.constant 0 : index
    %c0_42 = arith.constant 0 : index
    %175 = vector.load %arg5[%c0_41, %c0_42] : memref<32x128xf32, #tpu.memory_space<vmem>>, vector<32x128xf32>
    %cst_43 = arith.constant 0.000000e+00 : f32
    %176 = vector.broadcast %cst_43 : f32 to vector<1x32xf32>
    %cst_44 = arith.constant 0.000000e+00 : f32
    %177 = vector.broadcast %cst_44 : f32 to vector<1x32xf32>
    %178 = vector.extract_strided_slice %174 {offsets = [0, 0], sizes = [1, 128], strides = [1, 1]} : vector<8x128xf32> to vector<1x128xf32>
    %cst_45 = arith.constant dense<0.000000e+00> : vector<1x128xf32>
    %179 = tpu.matmul %176, %175, %cst_45 {dimension_numbers = #tpu.dot_dimension_numbers<[1], [0], [0], [1], [0, 0, 1, 1], [], []>} : vector<1x32xf32>, vector<32x128xf32>, vector<1x128xf32> -> vector<1x128xf32>
    %180 = arith.addf %178, %179 : vector<1x128xf32>
    %181 = vector.extract_strided_slice %180 {offsets = [0, 0], sizes = [1, 96], strides = [1, 1]} : vector<1x128xf32> to vector<1x96xf32>
    %182 = arith.negf %181 : vector<1x96xf32>
    %183 = math.exp %182 : vector<1x96xf32>
    %cst_46 = arith.constant 1.000000e+00 : f32
    %184 = vector.broadcast %cst_46 : f32 to vector<1x96xf32>
    %185 = arith.addf %184, %183 : vector<1x96xf32>
    %186 = arith.divf %184, %185 : vector<1x96xf32>
    %187 = vector.extract_strided_slice %180 {offsets = [0, 96], sizes = [1, 32], strides = [1, 1]} : vector<1x128xf32> to vector<1x32xf32>
    %188 = math.tanh %187 : vector<1x32xf32>
    %189 = vector.extract_strided_slice %186 {offsets = [0, 32], sizes = [1, 32], strides = [1, 1]} : vector<1x96xf32> to vector<1x32xf32>
    %190 = arith.mulf %189, %177 : vector<1x32xf32>
    %191 = vector.extract_strided_slice %186 {offsets = [0, 0], sizes = [1, 32], strides = [1, 1]} : vector<1x96xf32> to vector<1x32xf32>
    %192 = arith.mulf %191, %188 : vector<1x32xf32>
    %193 = arith.addf %190, %192 : vector<1x32xf32>
    %194 = vector.extract_strided_slice %186 {offsets = [0, 64], sizes = [1, 32], strides = [1, 1]} : vector<1x96xf32> to vector<1x32xf32>
    %195 = math.tanh %193 : vector<1x32xf32>
    %196 = arith.mulf %194, %195 : vector<1x32xf32>
    %c0_47 = arith.constant 0 : index
    %c0_48 = arith.constant 0 : index
    %197 = vector.load %arg12[%c0_47, %c0_48] : memref<8x32xf32, #tpu.memory_space<vmem>>, vector<1x32xf32>
    tpu.vector_store %arg12[%c0_47, %c0_48], %196 {strides = array<i32>} : memref<8x32xf32, #tpu.memory_space<vmem>>, vector<1x32xf32>,
    %198 = vector.extract_strided_slice %174 {offsets = [1, 0], sizes = [1, 128], strides = [1, 1]} : vector<8x128xf32> to vector<1x128xf32>
    %cst_49 = arith.constant dense<0.000000e+00> : vector<1x128xf32>
    %199 = tpu.matmul %196, %175, %cst_49 {dimension_numbers = #tpu.dot_dimension_numbers<[1], [0], [0], [1], [0, 0, 1, 1], [], []>} : vector<1x32xf32>, vector<32x128xf32>, vector<1x128xf32> -> vector<1x128xf32>
    %200 = arith.addf %198, %199 : vector<1x128xf32>
    %201 = vector.extract_strided_slice %200 {offsets = [0, 0], sizes = [1, 96], strides = [1, 1]} : vector<1x128xf32> to vector<1x96xf32>
    %202 = arith.negf %201 : vector<1x96xf32>
    %203 = math.exp %202 : vector<1x96xf32>
    %cst_50 = arith.constant 1.000000e+00 : f32
    %204 = vector.broadcast %cst_50 : f32 to vector<1x96xf32>
    %205 = arith.addf %204, %203 : vector<1x96xf32>
    %206 = arith.divf %204, %205 : vector<1x96xf32>
    %207 = vector.extract_strided_slice %200 {offsets = [0, 96], sizes = [1, 32], strides = [1, 1]} : vector<1x128xf32> to vector<1x32xf32>
    %208 = math.tanh %207 : vector<1x32xf32>
    %209 = vector.extract_strided_slice %206 {offsets = [0, 32], sizes = [1, 32], strides = [1, 1]} : vector<1x96xf32> to vector<1x32xf32>
    %210 = arith.mulf %209, %193 : vector<1x32xf32>
    %211 = vector.extract_strided_slice %206 {offsets = [0, 0], sizes = [1, 32], strides = [1, 1]} : vector<1x96xf32> to vector<1x32xf32>
    %212 = arith.mulf %211, %208 : vector<1x32xf32>
    %213 = arith.addf %210, %212 : vector<1x32xf32>
    %214 = vector.extract_strided_slice %206 {offsets = [0, 64], sizes = [1, 32], strides = [1, 1]} : vector<1x96xf32> to vector<1x32xf32>
    %215 = math.tanh %213 : vector<1x32xf32>
    %216 = arith.mulf %214, %215 : vector<1x32xf32>
    %c1_51 = arith.constant 1 : index
    %c0_52 = arith.constant 0 : index
    %217 = vector.load %arg12[%c1_51, %c0_52] : memref<8x32xf32, #tpu.memory_space<vmem>>, vector<1x32xf32>
    tpu.vector_store %arg12[%c1_51, %c0_52], %216 {strides = array<i32>} : memref<8x32xf32, #tpu.memory_space<vmem>>, vector<1x32xf32>,
    %218 = vector.extract_strided_slice %174 {offsets = [2, 0], sizes = [1, 128], strides = [1, 1]} : vector<8x128xf32> to vector<1x128xf32>
    %cst_53 = arith.constant dense<0.000000e+00> : vector<1x128xf32>
    %219 = tpu.matmul %216, %175, %cst_53 {dimension_numbers = #tpu.dot_dimension_numbers<[1], [0], [0], [1], [0, 0, 1, 1], [], []>} : vector<1x32xf32>, vector<32x128xf32>, vector<1x128xf32> -> vector<1x128xf32>
    %220 = arith.addf %218, %219 : vector<1x128xf32>
    %221 = vector.extract_strided_slice %220 {offsets = [0, 0], sizes = [1, 96], strides = [1, 1]} : vector<1x128xf32> to vector<1x96xf32>
    %222 = arith.negf %221 : vector<1x96xf32>
    %223 = math.exp %222 : vector<1x96xf32>
    %cst_54 = arith.constant 1.000000e+00 : f32
    %224 = vector.broadcast %cst_54 : f32 to vector<1x96xf32>
    %225 = arith.addf %224, %223 : vector<1x96xf32>
    %226 = arith.divf %224, %225 : vector<1x96xf32>
    %227 = vector.extract_strided_slice %220 {offsets = [0, 96], sizes = [1, 32], strides = [1, 1]} : vector<1x128xf32> to vector<1x32xf32>
    %228 = math.tanh %227 : vector<1x32xf32>
    %229 = vector.extract_strided_slice %226 {offsets = [0, 32], sizes = [1, 32], strides = [1, 1]} : vector<1x96xf32> to vector<1x32xf32>
    %230 = arith.mulf %229, %213 : vector<1x32xf32>
    %231 = vector.extract_strided_slice %226 {offsets = [0, 0], sizes = [1, 32], strides = [1, 1]} : vector<1x96xf32> to vector<1x32xf32>
    %232 = arith.mulf %231, %228 : vector<1x32xf32>
    %233 = arith.addf %230, %232 : vector<1x32xf32>
    %234 = vector.extract_strided_slice %226 {offsets = [0, 64], sizes = [1, 32], strides = [1, 1]} : vector<1x96xf32> to vector<1x32xf32>
    %235 = math.tanh %233 : vector<1x32xf32>
    %236 = arith.mulf %234, %235 : vector<1x32xf32>
    %c2_55 = arith.constant 2 : index
    %c0_56 = arith.constant 0 : index
    %237 = vector.load %arg12[%c2_55, %c0_56] : memref<8x32xf32, #tpu.memory_space<vmem>>, vector<1x32xf32>
    tpu.vector_store %arg12[%c2_55, %c0_56], %236 {strides = array<i32>} : memref<8x32xf32, #tpu.memory_space<vmem>>, vector<1x32xf32>,
    %238 = vector.extract_strided_slice %174 {offsets = [3, 0], sizes = [1, 128], strides = [1, 1]} : vector<8x128xf32> to vector<1x128xf32>
    %cst_57 = arith.constant dense<0.000000e+00> : vector<1x128xf32>
    %239 = tpu.matmul %236, %175, %cst_57 {dimension_numbers = #tpu.dot_dimension_numbers<[1], [0], [0], [1], [0, 0, 1, 1], [], []>} : vector<1x32xf32>, vector<32x128xf32>, vector<1x128xf32> -> vector<1x128xf32>
    %240 = arith.addf %238, %239 : vector<1x128xf32>
    %241 = vector.extract_strided_slice %240 {offsets = [0, 0], sizes = [1, 96], strides = [1, 1]} : vector<1x128xf32> to vector<1x96xf32>
    %242 = arith.negf %241 : vector<1x96xf32>
    %243 = math.exp %242 : vector<1x96xf32>
    %cst_58 = arith.constant 1.000000e+00 : f32
    %244 = vector.broadcast %cst_58 : f32 to vector<1x96xf32>
    %245 = arith.addf %244, %243 : vector<1x96xf32>
    %246 = arith.divf %244, %245 : vector<1x96xf32>
    %247 = vector.extract_strided_slice %240 {offsets = [0, 96], sizes = [1, 32], strides = [1, 1]} : vector<1x128xf32> to vector<1x32xf32>
    %248 = math.tanh %247 : vector<1x32xf32>
    %249 = vector.extract_strided_slice %246 {offsets = [0, 32], sizes = [1, 32], strides = [1, 1]} : vector<1x96xf32> to vector<1x32xf32>
    %250 = arith.mulf %249, %233 : vector<1x32xf32>
    %251 = vector.extract_strided_slice %246 {offsets = [0, 0], sizes = [1, 32], strides = [1, 1]} : vector<1x96xf32> to vector<1x32xf32>
    %252 = arith.mulf %251, %248 : vector<1x32xf32>
    %253 = arith.addf %250, %252 : vector<1x32xf32>
    %254 = vector.extract_strided_slice %246 {offsets = [0, 64], sizes = [1, 32], strides = [1, 1]} : vector<1x96xf32> to vector<1x32xf32>
    %255 = math.tanh %253 : vector<1x32xf32>
    %256 = arith.mulf %254, %255 : vector<1x32xf32>
    %c3_59 = arith.constant 3 : index
    %c0_60 = arith.constant 0 : index
    %257 = vector.load %arg12[%c3_59, %c0_60] : memref<8x32xf32, #tpu.memory_space<vmem>>, vector<1x32xf32>
    tpu.vector_store %arg12[%c3_59, %c0_60], %256 {strides = array<i32>} : memref<8x32xf32, #tpu.memory_space<vmem>>, vector<1x32xf32>,
    %258 = vector.extract_strided_slice %174 {offsets = [4, 0], sizes = [1, 128], strides = [1, 1]} : vector<8x128xf32> to vector<1x128xf32>
    %cst_61 = arith.constant dense<0.000000e+00> : vector<1x128xf32>
    %259 = tpu.matmul %256, %175, %cst_61 {dimension_numbers = #tpu.dot_dimension_numbers<[1], [0], [0], [1], [0, 0, 1, 1], [], []>} : vector<1x32xf32>, vector<32x128xf32>, vector<1x128xf32> -> vector<1x128xf32>
    %260 = arith.addf %258, %259 : vector<1x128xf32>
    %261 = vector.extract_strided_slice %260 {offsets = [0, 0], sizes = [1, 96], strides = [1, 1]} : vector<1x128xf32> to vector<1x96xf32>
    %262 = arith.negf %261 : vector<1x96xf32>
    %263 = math.exp %262 : vector<1x96xf32>
    %cst_62 = arith.constant 1.000000e+00 : f32
    %264 = vector.broadcast %cst_62 : f32 to vector<1x96xf32>
    %265 = arith.addf %264, %263 : vector<1x96xf32>
    %266 = arith.divf %264, %265 : vector<1x96xf32>
    %267 = vector.extract_strided_slice %260 {offsets = [0, 96], sizes = [1, 32], strides = [1, 1]} : vector<1x128xf32> to vector<1x32xf32>
    %268 = math.tanh %267 : vector<1x32xf32>
    %269 = vector.extract_strided_slice %266 {offsets = [0, 32], sizes = [1, 32], strides = [1, 1]} : vector<1x96xf32> to vector<1x32xf32>
    %270 = arith.mulf %269, %253 : vector<1x32xf32>
    %271 = vector.extract_strided_slice %266 {offsets = [0, 0], sizes = [1, 32], strides = [1, 1]} : vector<1x96xf32> to vector<1x32xf32>
    %272 = arith.mulf %271, %268 : vector<1x32xf32>
    %273 = arith.addf %270, %272 : vector<1x32xf32>
    %274 = vector.extract_strided_slice %266 {offsets = [0, 64], sizes = [1, 32], strides = [1, 1]} : vector<1x96xf32> to vector<1x32xf32>
    %275 = math.tanh %273 : vector<1x32xf32>
    %276 = arith.mulf %274, %275 : vector<1x32xf32>
    %c4_63 = arith.constant 4 : index
    %c0_64 = arith.constant 0 : index
    %277 = vector.load %arg12[%c4_63, %c0_64] : memref<8x32xf32, #tpu.memory_space<vmem>>, vector<1x32xf32>
    tpu.vector_store %arg12[%c4_63, %c0_64], %276 {strides = array<i32>} : memref<8x32xf32, #tpu.memory_space<vmem>>, vector<1x32xf32>,
    %278 = vector.extract_strided_slice %174 {offsets = [5, 0], sizes = [1, 128], strides = [1, 1]} : vector<8x128xf32> to vector<1x128xf32>
    %cst_65 = arith.constant dense<0.000000e+00> : vector<1x128xf32>
    %279 = tpu.matmul %276, %175, %cst_65 {dimension_numbers = #tpu.dot_dimension_numbers<[1], [0], [0], [1], [0, 0, 1, 1], [], []>} : vector<1x32xf32>, vector<32x128xf32>, vector<1x128xf32> -> vector<1x128xf32>
    %280 = arith.addf %278, %279 : vector<1x128xf32>
    %281 = vector.extract_strided_slice %280 {offsets = [0, 0], sizes = [1, 96], strides = [1, 1]} : vector<1x128xf32> to vector<1x96xf32>
    %282 = arith.negf %281 : vector<1x96xf32>
    %283 = math.exp %282 : vector<1x96xf32>
    %cst_66 = arith.constant 1.000000e+00 : f32
    %284 = vector.broadcast %cst_66 : f32 to vector<1x96xf32>
    %285 = arith.addf %284, %283 : vector<1x96xf32>
    %286 = arith.divf %284, %285 : vector<1x96xf32>
    %287 = vector.extract_strided_slice %280 {offsets = [0, 96], sizes = [1, 32], strides = [1, 1]} : vector<1x128xf32> to vector<1x32xf32>
    %288 = math.tanh %287 : vector<1x32xf32>
    %289 = vector.extract_strided_slice %286 {offsets = [0, 32], sizes = [1, 32], strides = [1, 1]} : vector<1x96xf32> to vector<1x32xf32>
    %290 = arith.mulf %289, %273 : vector<1x32xf32>
    %291 = vector.extract_strided_slice %286 {offsets = [0, 0], sizes = [1, 32], strides = [1, 1]} : vector<1x96xf32> to vector<1x32xf32>
    %292 = arith.mulf %291, %288 : vector<1x32xf32>
    %293 = arith.addf %290, %292 : vector<1x32xf32>
    %294 = vector.extract_strided_slice %286 {offsets = [0, 64], sizes = [1, 32], strides = [1, 1]} : vector<1x96xf32> to vector<1x32xf32>
    %295 = math.tanh %293 : vector<1x32xf32>
    %296 = arith.mulf %294, %295 : vector<1x32xf32>
    %c5_67 = arith.constant 5 : index
    %c0_68 = arith.constant 0 : index
    %297 = vector.load %arg12[%c5_67, %c0_68] : memref<8x32xf32, #tpu.memory_space<vmem>>, vector<1x32xf32>
    tpu.vector_store %arg12[%c5_67, %c0_68], %296 {strides = array<i32>} : memref<8x32xf32, #tpu.memory_space<vmem>>, vector<1x32xf32>,
    %298 = vector.extract_strided_slice %174 {offsets = [6, 0], sizes = [1, 128], strides = [1, 1]} : vector<8x128xf32> to vector<1x128xf32>
    %cst_69 = arith.constant dense<0.000000e+00> : vector<1x128xf32>
    %299 = tpu.matmul %296, %175, %cst_69 {dimension_numbers = #tpu.dot_dimension_numbers<[1], [0], [0], [1], [0, 0, 1, 1], [], []>} : vector<1x32xf32>, vector<32x128xf32>, vector<1x128xf32> -> vector<1x128xf32>
    %300 = arith.addf %298, %299 : vector<1x128xf32>
    %301 = vector.extract_strided_slice %300 {offsets = [0, 0], sizes = [1, 96], strides = [1, 1]} : vector<1x128xf32> to vector<1x96xf32>
    %302 = arith.negf %301 : vector<1x96xf32>
    %303 = math.exp %302 : vector<1x96xf32>
    %cst_70 = arith.constant 1.000000e+00 : f32
    %304 = vector.broadcast %cst_70 : f32 to vector<1x96xf32>
    %305 = arith.addf %304, %303 : vector<1x96xf32>
    %306 = arith.divf %304, %305 : vector<1x96xf32>
    %307 = vector.extract_strided_slice %300 {offsets = [0, 96], sizes = [1, 32], strides = [1, 1]} : vector<1x128xf32> to vector<1x32xf32>
    %308 = math.tanh %307 : vector<1x32xf32>
    %309 = vector.extract_strided_slice %306 {offsets = [0, 32], sizes = [1, 32], strides = [1, 1]} : vector<1x96xf32> to vector<1x32xf32>
    %310 = arith.mulf %309, %293 : vector<1x32xf32>
    %311 = vector.extract_strided_slice %306 {offsets = [0, 0], sizes = [1, 32], strides = [1, 1]} : vector<1x96xf32> to vector<1x32xf32>
    %312 = arith.mulf %311, %308 : vector<1x32xf32>
    %313 = arith.addf %310, %312 : vector<1x32xf32>
    %314 = vector.extract_strided_slice %306 {offsets = [0, 64], sizes = [1, 32], strides = [1, 1]} : vector<1x96xf32> to vector<1x32xf32>
    %315 = math.tanh %313 : vector<1x32xf32>
    %316 = arith.mulf %314, %315 : vector<1x32xf32>
    %c6_71 = arith.constant 6 : index
    %c0_72 = arith.constant 0 : index
    %317 = vector.load %arg12[%c6_71, %c0_72] : memref<8x32xf32, #tpu.memory_space<vmem>>, vector<1x32xf32>
    tpu.vector_store %arg12[%c6_71, %c0_72], %316 {strides = array<i32>} : memref<8x32xf32, #tpu.memory_space<vmem>>, vector<1x32xf32>,
    %318 = vector.extract_strided_slice %174 {offsets = [7, 0], sizes = [1, 128], strides = [1, 1]} : vector<8x128xf32> to vector<1x128xf32>
    %cst_73 = arith.constant dense<0.000000e+00> : vector<1x128xf32>
    %319 = tpu.matmul %316, %175, %cst_73 {dimension_numbers = #tpu.dot_dimension_numbers<[1], [0], [0], [1], [0, 0, 1, 1], [], []>} : vector<1x32xf32>, vector<32x128xf32>, vector<1x128xf32> -> vector<1x128xf32>
    %320 = arith.addf %318, %319 : vector<1x128xf32>
    %321 = vector.extract_strided_slice %320 {offsets = [0, 0], sizes = [1, 96], strides = [1, 1]} : vector<1x128xf32> to vector<1x96xf32>
    %322 = arith.negf %321 : vector<1x96xf32>
    %323 = math.exp %322 : vector<1x96xf32>
    %cst_74 = arith.constant 1.000000e+00 : f32
    %324 = vector.broadcast %cst_74 : f32 to vector<1x96xf32>
    %325 = arith.addf %324, %323 : vector<1x96xf32>
    %326 = arith.divf %324, %325 : vector<1x96xf32>
    %327 = vector.extract_strided_slice %320 {offsets = [0, 96], sizes = [1, 32], strides = [1, 1]} : vector<1x128xf32> to vector<1x32xf32>
    %328 = math.tanh %327 : vector<1x32xf32>
    %329 = vector.extract_strided_slice %326 {offsets = [0, 32], sizes = [1, 32], strides = [1, 1]} : vector<1x96xf32> to vector<1x32xf32>
    %330 = arith.mulf %329, %313 : vector<1x32xf32>
    %331 = vector.extract_strided_slice %326 {offsets = [0, 0], sizes = [1, 32], strides = [1, 1]} : vector<1x96xf32> to vector<1x32xf32>
    %332 = arith.mulf %331, %328 : vector<1x32xf32>
    %333 = arith.addf %330, %332 : vector<1x32xf32>
    %334 = vector.extract_strided_slice %326 {offsets = [0, 64], sizes = [1, 32], strides = [1, 1]} : vector<1x96xf32> to vector<1x32xf32>
    %335 = math.tanh %333 : vector<1x32xf32>
    %336 = arith.mulf %334, %335 : vector<1x32xf32>
    %c7_75 = arith.constant 7 : index
    %c0_76 = arith.constant 0 : index
    %337 = vector.load %arg12[%c7_75, %c0_76] : memref<8x32xf32, #tpu.memory_space<vmem>>, vector<1x32xf32>
    tpu.vector_store %arg12[%c7_75, %c0_76], %336 {strides = array<i32>} : memref<8x32xf32, #tpu.memory_space<vmem>>, vector<1x32xf32>,
    %c0_77 = arith.constant 0 : index
    %c0_78 = arith.constant 0 : index
    %338 = vector.load %arg12[%c0_77, %c0_78] : memref<8x32xf32, #tpu.memory_space<vmem>>, vector<8x32xf32>
    %c0_79 = arith.constant 0 : index
    %c0_80 = arith.constant 0 : index
    %339 = vector.load %arg7[%c0_79, %c0_80] : memref<32x16xf32, #tpu.memory_space<vmem>>, vector<32x16xf32>
    %cst_81 = arith.constant dense<0.000000e+00> : vector<8x16xf32>
    %340 = tpu.matmul %338, %339, %cst_81 {dimension_numbers = #tpu.dot_dimension_numbers<[1], [0], [0], [1], [0, 0, 1, 1], [], []>} : vector<8x32xf32>, vector<32x16xf32>, vector<8x16xf32> -> vector<8x16xf32>
    %c0_82 = arith.constant 0 : index
    %c0_83 = arith.constant 0 : index
    %341 = vector.load %arg8[%c0_82, %c0_83] : memref<1x16xf32, #tpu.memory_space<vmem>>, vector<1x16xf32>
    %342 = vector.broadcast %341 : vector<1x16xf32> to vector<8x16xf32>
    %343 = arith.addf %340, %342 : vector<8x16xf32>
    %cst_84 = arith.constant 0.000000e+00 : f32
    %344 = vector.broadcast %cst_84 : f32 to vector<8x16xf32>
    %345 = arith.maximumf %343, %344 : vector<8x16xf32>
    %c0_85 = arith.constant 0 : index
    %c0_86 = arith.constant 0 : index
    %346 = vector.load %arg9[%c0_85, %c0_86] : memref<1x16xf32, #tpu.memory_space<vmem>>, vector<1x16xf32>
    %347 = vector.broadcast %346 : vector<1x16xf32> to vector<8x16xf32>
    %348 = arith.mulf %345, %347 : vector<8x16xf32>
    %cst_87 = arith.constant dense<0.000000e+00> : vector<8xf32>
    %349 = vector.multi_reduction <add>, %348, %cst_87 [1] : vector<8x16xf32> to vector<8xf32>
    %350 = vector.shape_cast %349 : vector<8xf32> to vector<8x1xf32>
    %c0_88 = arith.constant 0 : index
    %c0_89 = arith.constant 0 : index
    %351 = vector.load %arg10[%c0_88, %c0_89] : memref<1x1xf32, #tpu.memory_space<vmem>>, vector<1x1xf32>
    %352 = vector.broadcast %351 : vector<1x1xf32> to vector<8x1xf32>
    %353 = arith.addf %350, %352 : vector<8x1xf32>
    %c0_90 = arith.constant 0 : index
    %c0_91 = arith.constant 0 : index
    %354 = vector.load %arg11[%c0_90, %c0_91] : memref<8x1xf32, #tpu.memory_space<vmem>>, vector<8x1xf32>
    tpu.vector_store %arg11[%c0_90, %c0_91], %353 {strides = array<i32>} : memref<8x1xf32, #tpu.memory_space<vmem>>, vector<8x1xf32>,
    return
  }
}

</mosaic_0001>

<llo_original>
// kernel: simple_lstm_forward.1
$region0: #{simple_lstm_forward.1}
  #allocation0 [shape = 'u32[]', space=smem, size = 0x4, offset = 0x4, fixed_abs, tag = 'smem constant byte address 0x4 - core index']
  #allocation1 [shape = 'u32[144,128]{1,0:T(1,128)}', space=vmem, size = 0x12000, scoped, tag = 'internal scratch']
  #allocation2 [shape = 'f32[8,32]{1,0:T(8,128)}', space=vmem, size = 0x1000, scoped, tag = 'scratch operand']
  #allocation3 [shape = 'f32[1,1]{1,0:T(1,128)S(1)}', space=vmem, size = 0x200, scoped, tag = 'scoped memory for simple_lstm_forward.1']
  %s0 = inlined_call_operand.vmem [shape: f32[8,8], index: 0, kind: input, shape index: {}]
  %s1 = inlined_call_operand.hbm [shape: f32[8,128], index: 1, kind: input, shape index: {}]
  %s2 = inlined_call_operand.vmem [shape: f32[32,128], index: 2, kind: input, shape index: {}]
  %s3 = inlined_call_operand.hbm [shape: f32[1,128], index: 3, kind: input, shape index: {}]
  %s4 = inlined_call_operand.vmem [shape: f32[32,128], index: 4, kind: input, shape index: {}]
  %s5 = inlined_call_operand.hbm [shape: f32[32,128], index: 5, kind: input, shape index: {}]
  %s6 = inlined_call_operand.hbm [shape: f32[1,128], index: 6, kind: input, shape index: {}]
  %s7 = inlined_call_operand.vmem [shape: f32[32,16], index: 7, kind: input, shape index: {}]
  %s8 = inlined_call_operand.hbm [shape: f32[1,16], index: 8, kind: input, shape index: {}]
  %s9 = inlined_call_operand.vmem [shape: f32[1,16], index: 9, kind: input, shape index: {}]
  %s10 = inlined_call_operand.<no memory space> [shape: f32[1,1], index: 10, kind: input, shape index: {}]
  %s11 = inlined_call_operand.vmem [shape: f32[8,1], index: 11, kind: output, shape index: {}]
  %s12 = sld [smem:[#allocation0]]
  $region74: #{simple_lstm_forward.1} parent=0
    _
  %s14 = ssub.s32 1, %s12
  %s15 = scalar_select 0, %s14, %s12
  %v16 = vstv %s10
  %17 = vst [vmem:[#allocation3] sm:$0x1] %v16
  $region1: #{simple_lstm_forward.1} parent=0
    #allocation4 [shape = 'u8[4096]{0}', space=vmem, size = 0x1000, scoped, tag = 'input window, operand 1, single buffered']
    #allocation5 [shape = 's32[1]{0}', space=sflag, size = 0x4, scoped, tag = 'scoped memory for simple_lstm_forward.1']
    #allocation6 [shape = 'u8[512]{0}', space=vmem, size = 0x400, scoped, tag = 'input window, operand 3, single buffered']
    #allocation7 [shape = 's32[1]{0}', space=sflag, size = 0x4, scoped, tag = 'scoped memory for simple_lstm_forward.1']
    #allocation8 [shape = 'u8[16384]{0}', space=vmem, size = 0x4000, scoped, tag = 'input window, operand 5, single buffered']
    #allocation9 [shape = 'u8[512]{0}', space=vmem, size = 0x400, scoped, tag = 'input window, operand 6, single buffered']
    #allocation10 [shape = 's32[1]{0}', space=sflag, size = 0x4, scoped, tag = 'scoped memory for simple_lstm_forward.1']
    #allocation11 [shape = 'u8[512]{0}', space=vmem, size = 0x400, scoped, tag = 'input window, operand 8, single buffered']
    %18 = vsyncpa [#allocation5], 0
    %19 = vsyncpa [#allocation7], 0
    %20 = vsyncpa [#allocation10], 0
    // Predicated region
    $region2: #{simple_lstm_forward.1} parent=1 // pred_check
      _
    $region3: #{simple_lstm_forward.1} parent=1 // pred_check_branch
      %22 = sbr.rel (0) target = $region5
    $region4: #{simple_lstm_forward.1} parent=1 // pred_region
      _
    $region5: #{simple_lstm_forward.1} parent=1 // pred_fallthru
      _
    // Predicated region
    $region6: #{simple_lstm_forward.1} parent=1 // pred_check
      _
    $region7: #{simple_lstm_forward.1} parent=1 // pred_check_branch
      %24 = sbr.rel (0) target = $region9
    $region8: #{simple_lstm_forward.1} parent=1 // pred_region
      %s26 = ssub.s32 128, 128
      %27 = vsyncadd [#allocation5], %s26
      %s29 = sshll.u32 [#allocation4], 4
      %s30 = int_to_ptr.vmem [resolvable:$true] %s29
      %32 = dma.hbm_to_vmem [thread:$0]  %s1, 128, %s30, [#allocation5]
    $region9: #{simple_lstm_forward.1} parent=1 // pred_fallthru
      _
    // Predicated region
    $region10: #{simple_lstm_forward.1} parent=1 // pred_check
      _
    $region11: #{simple_lstm_forward.1} parent=1 // pred_check_branch
      %34 = sbr.rel (0) target = $region13
    $region12: #{simple_lstm_forward.1} parent=1 // pred_region
      _
    $region13: #{simple_lstm_forward.1} parent=1 // pred_fallthru
      _
    // Predicated region
    $region14: #{simple_lstm_forward.1} parent=1 // pred_check
      _
    $region15: #{simple_lstm_forward.1} parent=1 // pred_check_branch
      %36 = sbr.rel (0) target = $region17
    $region16: #{simple_lstm_forward.1} parent=1 // pred_region
      %s38 = ssub.s32 16, 16
      %39 = vsyncadd [#allocation7], %s38
      %s41 = sshll.u32 [#allocation6], 4
      %s42 = int_to_ptr.vmem [resolvable:$true] %s41
      %44 = dma.hbm_to_vmem [thread:$0]  %s3, 16, %s42, [#allocation7]
    $region17: #{simple_lstm_forward.1} parent=1 // pred_fallthru
      _
    // Predicated region
    $region18: #{simple_lstm_forward.1} parent=1 // pred_check
      _
    $region19: #{simple_lstm_forward.1} parent=1 // pred_check_branch
      %46 = sbr.rel (0) target = $region21
    $region20: #{simple_lstm_forward.1} parent=1 // pred_region
      _
    $region21: #{simple_lstm_forward.1} parent=1 // pred_fallthru
      _
    // Predicated region
    $region22: #{simple_lstm_forward.1} parent=1 // pred_check
      _
    $region23: #{simple_lstm_forward.1} parent=1 // pred_check_branch
      %48 = sbr.rel (0) target = $region25
    $region24: #{simple_lstm_forward.1} parent=1 // pred_region
      %s50 = ssub.s32 512, 512
      %51 = vsyncadd [#allocation7], %s50
      %s52 = sshll.u32 [#allocation8], 4
      %s53 = int_to_ptr.vmem [resolvable:$true] %s52
      %58 = dma.hbm_to_vmem [thread:$0]  %s5, 512, %s53, [#allocation7], 128, 128, 8
    $region25: #{simple_lstm_forward.1} parent=1 // pred_fallthru
      _
    // Predicated region
    $region26: #{simple_lstm_forward.1} parent=1 // pred_check
      _
    $region27: #{simple_lstm_forward.1} parent=1 // pred_check_branch
      %60 = sbr.rel (0) target = $region29
    $region28: #{simple_lstm_forward.1} parent=1 // pred_region
      %s62 = ssub.s32 16, 16
      %63 = vsyncadd [#allocation10], %s62
      %s65 = sshll.u32 [#allocation9], 4
      %s66 = int_to_ptr.vmem [resolvable:$true] %s65
      %68 = dma.hbm_to_vmem [thread:$0]  %s6, 16, %s66, [#allocation10]
    $region29: #{simple_lstm_forward.1} parent=1 // pred_fallthru
      _
    // Predicated region
    $region30: #{simple_lstm_forward.1} parent=1 // pred_check
      _
    $region31: #{simple_lstm_forward.1} parent=1 // pred_check_branch
      %70 = sbr.rel (0) target = $region33
    $region32: #{simple_lstm_forward.1} parent=1 // pred_region
      _
    $region33: #{simple_lstm_forward.1} parent=1 // pred_fallthru
      _
    // Predicated region
    $region34: #{simple_lstm_forward.1} parent=1 // pred_check
      _
    $region35: #{simple_lstm_forward.1} parent=1 // pred_check_branch
      %72 = sbr.rel (0) target = $region37
    $region36: #{simple_lstm_forward.1} parent=1 // pred_region
      %s74 = ssub.s32 16, 16
      %75 = vsyncadd [#allocation10], %s74
      %s77 = sshll.u32 [#allocation11], 4
      %s78 = int_to_ptr.vmem [resolvable:$true] %s77
      %80 = dma.hbm_to_vmem [thread:$0]  %s8, 16, %s78, [#allocation10]
    $region37: #{simple_lstm_forward.1} parent=1 // pred_fallthru
      _
    // Predicated region
    $region38: #{simple_lstm_forward.1} parent=1 // pred_check
      _
    $region39: #{simple_lstm_forward.1} parent=1 // pred_check_branch
      %82 = sbr.rel (0) target = $region41
    $region40: #{simple_lstm_forward.1} parent=1 // pred_region
      _
    $region41: #{simple_lstm_forward.1} parent=1 // pred_fallthru
      _
    // Predicated region
    $region42: #{simple_lstm_forward.1} parent=1 // pred_check
      _
    $region43: #{simple_lstm_forward.1} parent=1 // pred_check_branch
      %84 = sbr.rel (0) target = $region45
    $region44: #{simple_lstm_forward.1} parent=1 // pred_region
      _
    $region45: #{simple_lstm_forward.1} parent=1 // pred_fallthru
      _
    // Predicated region
    $region46: #{simple_lstm_forward.1} parent=1 // pred_check
      _
    $region47: #{simple_lstm_forward.1} parent=1 // pred_check_branch
      %86 = sbr.rel (0) target = $region49
    $region48: #{simple_lstm_forward.1} parent=1 // pred_region
      %87 = dma.done [#allocation5], 128
    $region49: #{simple_lstm_forward.1} parent=1 // pred_fallthru
      _
    // Predicated region
    $region50: #{simple_lstm_forward.1} parent=1 // pred_check
      _
    $region51: #{simple_lstm_forward.1} parent=1 // pred_check_branch
      %89 = sbr.rel (0) target = $region53
    $region52: #{simple_lstm_forward.1} parent=1 // pred_region
      %90 = dma.done [#allocation7], 16
    $region53: #{simple_lstm_forward.1} parent=1 // pred_fallthru
      _
    // Predicated region
    $region54: #{simple_lstm_forward.1} parent=1 // pred_check
      _
    $region55: #{simple_lstm_forward.1} parent=1 // pred_check_branch
      %92 = sbr.rel (0) target = $region57
    $region56: #{simple_lstm_forward.1} parent=1 // pred_region
      %93 = dma.done [#allocation7], 512
    $region57: #{simple_lstm_forward.1} parent=1 // pred_fallthru
      _
    // Predicated region
    $region58: #{simple_lstm_forward.1} parent=1 // pred_check
      _
    $region59: #{simple_lstm_forward.1} parent=1 // pred_check_branch
      %95 = sbr.rel (0) target = $region61
    $region60: #{simple_lstm_forward.1} parent=1 // pred_region
      %96 = dma.done [#allocation10], 16
    $region61: #{simple_lstm_forward.1} parent=1 // pred_fallthru
      _
    // Predicated region
    $region62: #{simple_lstm_forward.1} parent=1 // pred_check
      _
    $region63: #{simple_lstm_forward.1} parent=1 // pred_check_branch
      %98 = sbr.rel (0) target = $region65
    $region64: #{simple_lstm_forward.1} parent=1 // pred_region
      %99 = dma.done [#allocation10], 16
    $region65: #{simple_lstm_forward.1} parent=1 // pred_fallthru
      _
    %v100 = vld [vmem:[%s0] sm:$0xff]
    %v101 = vld [vmem:[#allocation4] sm:$0xff]
    %v102 = vld [vmem:[#allocation6] sm:$0x1]
    %v104 = vlaneseq
    %v105 = vshrl.u32 %v104, 7
    %v106 = vsub.s32 0, %v105
    %v107 = vrot.slane %v102, %v106
    %vm109 = vcmask 64512
    %v111 = vsel %vm109, %v100, 0
    %113 = vmatprep.subr.mxu0 0.0
    %114 = vmatpush1.msra.mxu0 0.0
    %115 = vmatprep.subr.mxu0 0.0
    %116 = vmatpush1.msra.mxu0 0.0
    %117 = vmatprep.subr.mxu0 0.0
    %118 = vmatpush1.msra.mxu0 0.0
    %119 = vmatprep.subr.mxu0 0.0
    %120 = vmatpush1.msra.mxu0 0.0
    %121 = vmatprep.subr.mxu0 0.0
    %122 = vmatpush1.msra.mxu0 0.0
    %123 = vmatprep.subr.mxu0 0.0
    %124 = vmatpush1.msra.mxu0 0.0
    %125 = vmatprep.subr.mxu0 0.0
    %126 = vmatpush1.msra.mxu0 0.0
    %127 = vmatprep.subr.mxu0 0.0
    %128 = vmatpush1.msra.mxu0 0.0
    %129 = vmatprep.subr.mxu0 0.0
    %130 = vmatpush1.msra.mxu0 0.0
    %131 = vmatprep.subr.mxu0 0.0
    %132 = vmatpush1.msra.mxu0 0.0
    %133 = vmatprep.subr.mxu0 0.0
    %134 = vmatpush1.msra.mxu0 0.0
    %135 = vmatprep.subr.mxu0 0.0
    %136 = vmatpush1.msra.mxu0 0.0
    %137 = vmatprep.subr.mxu0 0.0
    %138 = vmatpush1.msra.mxu0 0.0
    %139 = vmatprep.subr.mxu0 0.0
    %140 = vmatpush1.msra.mxu0 0.0
    %141 = vmatprep.subr.mxu0 0.0
    %142 = vmatpush1.msra.mxu0 0.0
    %143 = vmatprep.subr.mxu0 0.0
    %144 = vmatpush1.msra.mxu0 %v101
    %145 = vmatprep.subr.mxu0 0.0
    %146 = vmatpush2.msra.mxu0 0.0
    %147 = vmatprep.subr.mxu0 0.0
    %148 = vmatpush2.msra.mxu0 0.0
    %149 = vmatprep.subr.mxu0 0.0
    %150 = vmatpush2.msra.mxu0 0.0
    %151 = vmatprep.subr.mxu0 0.0
    %152 = vmatpush2.msra.mxu0 0.0
    %153 = vmatprep.subr.mxu0 0.0
    %154 = vmatpush2.msra.mxu0 0.0
    %155 = vmatprep.subr.mxu0 0.0
    %156 = vmatpush2.msra.mxu0 0.0
    %157 = vmatprep.subr.mxu0 0.0
    %158 = vmatpush2.msra.mxu0 0.0
    %159 = vmatprep.subr.mxu0 0.0
    %160 = vmatpush2.msra.mxu0 0.0
    %161 = vmatprep.subr.mxu0 0.0
    %162 = vmatpush2.msra.mxu0 0.0
    %163 = vmatprep.subr.mxu0 0.0
    %164 = vmatpush2.msra.mxu0 0.0
    %165 = vmatprep.subr.mxu0 0.0
    %166 = vmatpush2.msra.mxu0 0.0
    %167 = vmatprep.subr.mxu0 0.0
    %168 = vmatpush2.msra.mxu0 0.0
    %169 = vmatprep.subr.mxu0 0.0
    %170 = vmatpush2.msra.mxu0 0.0
    %171 = vmatprep.subr.mxu0 0.0
    %172 = vmatpush2.msra.mxu0 0.0
    %173 = vmatprep.subr.mxu0 0.0
    %174 = vmatpush2.msra.mxu0 0.0
    %175 = vmatprep.subr.mxu0 0.0
    %176 = vmatpush2.msra.mxu0 0.0
    %177 = vmatprep.mubr.f32.mxu0 0.0
    %178 = vmatmul.mubr.f32.gmra.mxu0 %v111
    %v179 = vpop.f32.mrf.mxu0
    %v180 = vadd.f32 %v107, %v179
    %v181 = vpop.f32.mrf.mxu0
    %182 = vdwg.mxu0
    %v183 = vld [vmem:[%s2] sm:$0xff]
    %v184 = vld [vmem:[%s2 + $0x8] sm:$0xff]
    %v185 = vld [vmem:[%s2 + $0x10] sm:$0xff]
    %v186 = vld [vmem:[%s2 + $0x18] sm:$0xff]
    %vm187 = vcmask 261120
    %v189 = vsel %vm187, 0.0, 0
    %191 = vmatprep.subr.mxu0 0.0
    %192 = vmatpush1.msra.mxu0 0.0
    %193 = vmatprep.subr.mxu0 0.0
    %194 = vmatpush1.msra.mxu0 0.0
    %195 = vmatprep.subr.mxu0 0.0
    %196 = vmatpush1.msra.mxu0 0.0
    %197 = vmatprep.subr.mxu0 0.0
    %198 = vmatpush1.msra.mxu0 0.0
    %199 = vmatprep.subr.mxu0 0.0
    %200 = vmatpush1.msra.mxu0 0.0
    %201 = vmatprep.subr.mxu0 0.0
    %202 = vmatpush1.msra.mxu0 0.0
    %203 = vmatprep.subr.mxu0 0.0
    %204 = vmatpush1.msra.mxu0 0.0
    %205 = vmatprep.subr.mxu0 0.0
    %206 = vmatpush1.msra.mxu0 0.0
    %207 = vmatprep.subr.mxu0 0.0
    %208 = vmatpush1.msra.mxu0 0.0
    %209 = vmatprep.subr.mxu0 0.0
    %210 = vmatpush1.msra.mxu0 0.0
    %211 = vmatprep.subr.mxu0 0.0
    %212 = vmatpush1.msra.mxu0 0.0
    %213 = vmatprep.subr.mxu0 0.0
    %214 = vmatpush1.msra.mxu0 0.0
    %215 = vmatprep.subr.mxu0 0.0
    %216 = vmatpush1.msra.mxu0 %v186
    %217 = vmatprep.subr.mxu0 0.0
    %218 = vmatpush1.msra.mxu0 %v185
    %219 = vmatprep.subr.mxu0 0.0
    %220 = vmatpush1.msra.mxu0 %v184
    %221 = vmatprep.subr.mxu0 0.0
    %222 = vmatpush1.msra.mxu0 %v183
    %223 = vmatprep.subr.mxu0 0.0
    %224 = vmatpush2.msra.mxu0 0.0
    %225 = vmatprep.subr.mxu0 0.0
    %226 = vmatpush2.msra.mxu0 0.0
    %227 = vmatprep.subr.mxu0 0.0
    %228 = vmatpush2.msra.mxu0 0.0
    %229 = vmatprep.subr.mxu0 0.0
    %230 = vmatpush2.msra.mxu0 0.0
    %231 = vmatprep.subr.mxu0 0.0
    %232 = vmatpush2.msra.mxu0 0.0
    %233 = vmatprep.subr.mxu0 0.0
    %234 = vmatpush2.msra.mxu0 0.0
    %235 = vmatprep.subr.mxu0 0.0
    %236 = vmatpush2.msra.mxu0 0.0
    %237 = vmatprep.subr.mxu0 0.0
    %238 = vmatpush2.msra.mxu0 0.0
    %239 = vmatprep.subr.mxu0 0.0
    %240 = vmatpush2.msra.mxu0 0.0
    %241 = vmatprep.subr.mxu0 0.0
    %242 = vmatpush2.msra.mxu0 0.0
    %243 = vmatprep.subr.mxu0 0.0
    %244 = vmatpush2.msra.mxu0 0.0
    %245 = vmatprep.subr.mxu0 0.0
    %246 = vmatpush2.msra.mxu0 0.0
    %247 = vmatprep.subr.mxu0 0.0
    %248 = vmatpush2.msra.mxu0 0.0
    %249 = vmatprep.subr.mxu0 0.0
    %250 = vmatpush2.msra.mxu0 0.0
    %251 = vmatprep.subr.mxu0 0.0
    %252 = vmatpush2.msra.mxu0 0.0
    %253 = vmatprep.subr.mxu0 0.0
    %254 = vmatpush2.msra.mxu0 0.0
    %255 = vmatprep.mubr.f32.mxu0 0.0
    %256 = vmatmul.mubr.f32.gmra.mxu0 %v189
    %v257 = vpop.f32.mrf.mxu0
    %v258 = vadd.f32 0.0, %v257
    %v259 = vpop.f32.mrf.mxu0
    %260 = vdwg.mxu0
    %v261 = vadd.f32 %v180, %v258
    %v262 = vxor.u32 %v261, 2147483648
    %v263 = vmul.f32 %v262, 1.442695
    %v264 = vpow.pop %v263
    %v265 = vadd.f32 %v264, 1.0
    %v266 = vrcp.pop %v265
    %v267 = vmul.f32 1.0, %v266
    %v268 = vtanh.pop %v261
    %v269 = vmul.f32 %v267, 0.0
    %271 = vrot.lane.b32.xlu0 %v268, 32
    %v272 = vpop.permute.xlu0 %271
    %v274 = vmul.f32 %v267, %v272
    %276 = vrot.lane.b32.xlu0 %v274, 32
    %v277 = vpop.permute.xlu0 %276
    %v279 = vadd.f32 %v269, %v277
    %v280 = vtanh.pop %v279
    %282 = vrot.lane.b32.xlu0 %v280, 32
    %v283 = vpop.permute.xlu0 %282
    %v285 = vmul.f32 %v267, %v283
    %287 = vrot.lane.b32.xlu0 %v285, 64
    %v288 = vpop.permute.xlu0 %287
    %vm290 = vcmask 253952
    %291 = vst.msk [vmem:[#allocation2] sm:$0x1] %vm290, %v288
    %v292 = vsel %vm187, %v288, 0
    %294 = vmatprep.subr.mxu0 0.0
    %295 = vmatpush1.msra.mxu0 0.0
    %296 = vmatprep.subr.mxu0 0.0
    %297 = vmatpush1.msra.mxu0 0.0
    %298 = vmatprep.subr.mxu0 0.0
    %299 = vmatpush1.msra.mxu0 0.0
    %300 = vmatprep.subr.mxu0 0.0
    %301 = vmatpush1.msra.mxu0 0.0
    %302 = vmatprep.subr.mxu0 0.0
    %303 = vmatpush1.msra.mxu0 0.0
    %304 = vmatprep.subr.mxu0 0.0
    %305 = vmatpush1.msra.mxu0 0.0
    %306 = vmatprep.subr.mxu0 0.0
    %307 = vmatpush1.msra.mxu0 0.0
    %308 = vmatprep.subr.mxu0 0.0
    %309 = vmatpush1.msra.mxu0 0.0
    %310 = vmatprep.subr.mxu0 0.0
    %311 = vmatpush1.msra.mxu0 0.0
    %312 = vmatprep.subr.mxu0 0.0
    %313 = vmatpush1.msra.mxu0 0.0
    %314 = vmatprep.subr.mxu0 0.0
    %315 = vmatpush1.msra.mxu0 0.0
    %316 = vmatprep.subr.mxu0 0.0
    %317 = vmatpush1.msra.mxu0 0.0
    %318 = vmatprep.subr.mxu0 0.0
    %319 = vmatpush1.msra.mxu0 %v186
    %320 = vmatprep.subr.mxu0 0.0
    %321 = vmatpush1.msra.mxu0 %v185
    %322 = vmatprep.subr.mxu0 0.0
    %323 = vmatpush1.msra.mxu0 %v184
    %324 = vmatprep.subr.mxu0 0.0
    %325 = vmatpush1.msra.mxu0 %v183
    %326 = vmatprep.subr.mxu0 0.0
    %327 = vmatpush2.msra.mxu0 0.0
    %328 = vmatprep.subr.mxu0 0.0
    %329 = vmatpush2.msra.mxu0 0.0
    %330 = vmatprep.subr.mxu0 0.0
    %331 = vmatpush2.msra.mxu0 0.0
    %332 = vmatprep.subr.mxu0 0.0
    %333 = vmatpush2.msra.mxu0 0.0
    %334 = vmatprep.subr.mxu0 0.0
    %335 = vmatpush2.msra.mxu0 0.0
    %336 = vmatprep.subr.mxu0 0.0
    %337 = vmatpush2.msra.mxu0 0.0
    %338 = vmatprep.subr.mxu0 0.0
    %339 = vmatpush2.msra.mxu0 0.0
    %340 = vmatprep.subr.mxu0 0.0
    %341 = vmatpush2.msra.mxu0 0.0
    %342 = vmatprep.subr.mxu0 0.0
    %343 = vmatpush2.msra.mxu0 0.0
    %344 = vmatprep.subr.mxu0 0.0
    %345 = vmatpush2.msra.mxu0 0.0
    %346 = vmatprep.subr.mxu0 0.0
    %347 = vmatpush2.msra.mxu0 0.0
    %348 = vmatprep.subr.mxu0 0.0
    %349 = vmatpush2.msra.mxu0 0.0
    %350 = vmatprep.subr.mxu0 0.0
    %351 = vmatpush2.msra.mxu0 0.0
    %352 = vmatprep.subr.mxu0 0.0
    %353 = vmatpush2.msra.mxu0 0.0
    %354 = vmatprep.subr.mxu0 0.0
    %355 = vmatpush2.msra.mxu0 0.0
    %356 = vmatprep.subr.mxu0 0.0
    %357 = vmatpush2.msra.mxu0 0.0
    %358 = vmatprep.mubr.f32.mxu0 0.0
    %359 = vmatmul.mubr.f32.gmra.mxu0 %v292
    %v360 = vpop.f32.mrf.mxu0
    %v361 = vadd.f32 0.0, %v360
    %v362 = vpop.f32.mrf.mxu0
    %363 = vdwg.mxu0
    %v365 = vrot.slane %v361, 7
    %v367 = vadd.f32 %v180, %v365
    %v368 = vxor.u32 %v367, 2147483648
    %v369 = vmul.f32 %v368, 1.442695
    %v370 = vpow.pop %v369
    %v371 = vadd.f32 %v370, 1.0
    %v372 = vrcp.pop %v371
    %v373 = vmul.f32 1.0, %v372
    %v374 = vtanh.pop %v367
    %v376 = vrot.slane %v279, 7
    %v378 = vmul.f32 %v373, %v376
    %380 = vrot.lane.b32.xlu0 %v374, 32
    %v381 = vpop.permute.xlu0 %380
    %v383 = vmul.f32 %v373, %v381
    %385 = vrot.lane.b32.xlu0 %v383, 32
    %v386 = vpop.permute.xlu0 %385
    %v388 = vadd.f32 %v378, %v386
    %v389 = vtanh.pop %v388
    %391 = vrot.lane.b32.xlu0 %v389, 32
    %v392 = vpop.permute.xlu0 %391
    %v394 = vmul.f32 %v373, %v392
    %396 = vrot.lane.b32.xlu0 %v394, 64
    %v397 = vpop.permute.xlu0 %396
    %vm399 = vcmask 254977
    %400 = vst.msk [vmem:[#allocation2] sm:$0x2] %vm399, %v397
    %v401 = vrot.slane %v394, 1
    %402 = vrot.lane.b32.xlu0 %v401, 64
    %v403 = vpop.permute.xlu0 %402
    %v404 = vsel %vm187, %v403, 0
    %406 = vmatprep.subr.mxu0 0.0
    %407 = vmatpush1.msra.mxu0 0.0
    %408 = vmatprep.subr.mxu0 0.0
    %409 = vmatpush1.msra.mxu0 0.0
    %410 = vmatprep.subr.mxu0 0.0
    %411 = vmatpush1.msra.mxu0 0.0
    %412 = vmatprep.subr.mxu0 0.0
    %413 = vmatpush1.msra.mxu0 0.0
    %414 = vmatprep.subr.mxu0 0.0
    %415 = vmatpush1.msra.mxu0 0.0
    %416 = vmatprep.subr.mxu0 0.0
    %417 = vmatpush1.msra.mxu0 0.0
    %418 = vmatprep.subr.mxu0 0.0
    %419 = vmatpush1.msra.mxu0 0.0
    %420 = vmatprep.subr.mxu0 0.0
    %421 = vmatpush1.msra.mxu0 0.0
    %422 = vmatprep.subr.mxu0 0.0
    %423 = vmatpush1.msra.mxu0 0.0
    %424 = vmatprep.subr.mxu0 0.0
    %425 = vmatpush1.msra.mxu0 0.0
    %426 = vmatprep.subr.mxu0 0.0
    %427 = vmatpush1.msra.mxu0 0.0
    %428 = vmatprep.subr.mxu0 0.0
    %429 = vmatpush1.msra.mxu0 0.0
    %430 = vmatprep.subr.mxu0 0.0
    %431 = vmatpush1.msra.mxu0 %v186
    %432 = vmatprep.subr.mxu0 0.0
    %433 = vmatpush1.msra.mxu0 %v185
    %434 = vmatprep.subr.mxu0 0.0
    %435 = vmatpush1.msra.mxu0 %v184
    %436 = vmatprep.subr.mxu0 0.0
    %437 = vmatpush1.msra.mxu0 %v183
    %438 = vmatprep.subr.mxu0 0.0
    %439 = vmatpush2.msra.mxu0 0.0
    %440 = vmatprep.subr.mxu0 0.0
    %441 = vmatpush2.msra.mxu0 0.0
    %442 = vmatprep.subr.mxu0 0.0
    %443 = vmatpush2.msra.mxu0 0.0
    %444 = vmatprep.subr.mxu0 0.0
    %445 = vmatpush2.msra.mxu0 0.0
    %446 = vmatprep.subr.mxu0 0.0
    %447 = vmatpush2.msra.mxu0 0.0
    %448 = vmatprep.subr.mxu0 0.0
    %449 = vmatpush2.msra.mxu0 0.0
    %450 = vmatprep.subr.mxu0 0.0
    %451 = vmatpush2.msra.mxu0 0.0
    %452 = vmatprep.subr.mxu0 0.0
    %453 = vmatpush2.msra.mxu0 0.0
    %454 = vmatprep.subr.mxu0 0.0
    %455 = vmatpush2.msra.mxu0 0.0
    %456 = vmatprep.subr.mxu0 0.0
    %457 = vmatpush2.msra.mxu0 0.0
    %458 = vmatprep.subr.mxu0 0.0
    %459 = vmatpush2.msra.mxu0 0.0
    %460 = vmatprep.subr.mxu0 0.0
    %461 = vmatpush2.msra.mxu0 0.0
    %462 = vmatprep.subr.mxu0 0.0
    %463 = vmatpush2.msra.mxu0 0.0
    %464 = vmatprep.subr.mxu0 0.0
    %465 = vmatpush2.msra.mxu0 0.0
    %466 = vmatprep.subr.mxu0 0.0
    %467 = vmatpush2.msra.mxu0 0.0
    %468 = vmatprep.subr.mxu0 0.0
    %469 = vmatpush2.msra.mxu0 0.0
    %470 = vmatprep.mubr.f32.mxu0 0.0
    %471 = vmatmul.mubr.f32.gmra.mxu0 %v404
    %v472 = vpop.f32.mrf.mxu0
    %v473 = vadd.f32 0.0, %v472
    %v474 = vpop.f32.mrf.mxu0
    %475 = vdwg.mxu0
    %v477 = vrot.slane %v473, 6
    %v479 = vadd.f32 %v180, %v477
    %v480 = vxor.u32 %v479, 2147483648
    %v481 = vmul.f32 %v480, 1.442695
    %v482 = vpow.pop %v481
    %v483 = vadd.f32 %v482, 1.0
    %v484 = vrcp.pop %v483
    %v485 = vmul.f32 1.0, %v484
    %v486 = vtanh.pop %v479
    %v488 = vrot.slane %v388, 7
    %v490 = vmul.f32 %v485, %v488
    %492 = vrot.lane.b32.xlu0 %v486, 32
    %v493 = vpop.permute.xlu0 %492
    %v495 = vmul.f32 %v485, %v493
    %497 = vrot.lane.b32.xlu0 %v495, 32
    %v498 = vpop.permute.xlu0 %497
    %v500 = vadd.f32 %v490, %v498
    %v501 = vtanh.pop %v500
    %503 = vrot.lane.b32.xlu0 %v501, 32
    %v504 = vpop.permute.xlu0 %503
    %v506 = vmul.f32 %v485, %v504
    %508 = vrot.lane.b32.xlu0 %v506, 64
    %v509 = vpop.permute.xlu0 %508
    %vm511 = vcmask 256002
    %512 = vst.msk [vmem:[#allocation2] sm:$0x4] %vm511, %v509
    %v513 = vrot.slane %v506, 2
    %514 = vrot.lane.b32.xlu0 %v513, 64
    %v515 = vpop.permute.xlu0 %514
    %v516 = vsel %vm187, %v515, 0
    %518 = vmatprep.subr.mxu0 0.0
    %519 = vmatpush1.msra.mxu0 0.0
    %520 = vmatprep.subr.mxu0 0.0
    %521 = vmatpush1.msra.mxu0 0.0
    %522 = vmatprep.subr.mxu0 0.0
    %523 = vmatpush1.msra.mxu0 0.0
    %524 = vmatprep.subr.mxu0 0.0
    %525 = vmatpush1.msra.mxu0 0.0
    %526 = vmatprep.subr.mxu0 0.0
    %527 = vmatpush1.msra.mxu0 0.0
    %528 = vmatprep.subr.mxu0 0.0
    %529 = vmatpush1.msra.mxu0 0.0
    %530 = vmatprep.subr.mxu0 0.0
    %531 = vmatpush1.msra.mxu0 0.0
    %532 = vmatprep.subr.mxu0 0.0
    %533 = vmatpush1.msra.mxu0 0.0
    %534 = vmatprep.subr.mxu0 0.0
    %535 = vmatpush1.msra.mxu0 0.0
    %536 = vmatprep.subr.mxu0 0.0
    %537 = vmatpush1.msra.mxu0 0.0
    %538 = vmatprep.subr.mxu0 0.0
    %539 = vmatpush1.msra.mxu0 0.0
    %540 = vmatprep.subr.mxu0 0.0
    %541 = vmatpush1.msra.mxu0 0.0
    %542 = vmatprep.subr.mxu0 0.0
    %543 = vmatpush1.msra.mxu0 %v186
    %544 = vmatprep.subr.mxu0 0.0
    %545 = vmatpush1.msra.mxu0 %v185
    %546 = vmatprep.subr.mxu0 0.0
    %547 = vmatpush1.msra.mxu0 %v184
    %548 = vmatprep.subr.mxu0 0.0
    %549 = vmatpush1.msra.mxu0 %v183
    %550 = vmatprep.subr.mxu0 0.0
    %551 = vmatpush2.msra.mxu0 0.0
    %552 = vmatprep.subr.mxu0 0.0
    %553 = vmatpush2.msra.mxu0 0.0
    %554 = vmatprep.subr.mxu0 0.0
    %555 = vmatpush2.msra.mxu0 0.0
    %556 = vmatprep.subr.mxu0 0.0
    %557 = vmatpush2.msra.mxu0 0.0
    %558 = vmatprep.subr.mxu0 0.0
    %559 = vmatpush2.msra.mxu0 0.0
    %560 = vmatprep.subr.mxu0 0.0
    %561 = vmatpush2.msra.mxu0 0.0
    %562 = vmatprep.subr.mxu0 0.0
    %563 = vmatpush2.msra.mxu0 0.0
    %564 = vmatprep.subr.mxu0 0.0
    %565 = vmatpush2.msra.mxu0 0.0
    %566 = vmatprep.subr.mxu0 0.0
    %567 = vmatpush2.msra.mxu0 0.0
    %568 = vmatprep.subr.mxu0 0.0
    %569 = vmatpush2.msra.mxu0 0.0
    %570 = vmatprep.subr.mxu0 0.0
    %571 = vmatpush2.msra.mxu0 0.0
    %572 = vmatprep.subr.mxu0 0.0
    %573 = vmatpush2.msra.mxu0 0.0
    %574 = vmatprep.subr.mxu0 0.0
    %575 = vmatpush2.msra.mxu0 0.0
    %576 = vmatprep.subr.mxu0 0.0
    %577 = vmatpush2.msra.mxu0 0.0
    %578 = vmatprep.subr.mxu0 0.0
    %579 = vmatpush2.msra.mxu0 0.0
    %580 = vmatprep.subr.mxu0 0.0
    %581 = vmatpush2.msra.mxu0 0.0
    %582 = vmatprep.mubr.f32.mxu0 0.0
    %583 = vmatmul.mubr.f32.gmra.mxu0 %v516
    %v584 = vpop.f32.mrf.mxu0
    %v585 = vadd.f32 0.0, %v584
    %v586 = vpop.f32.mrf.mxu0
    %587 = vdwg.mxu0
    %v589 = vrot.slane %v585, 5
    %v591 = vadd.f32 %v180, %v589
    %v592 = vxor.u32 %v591, 2147483648
    %v593 = vmul.f32 %v592, 1.442695
    %v594 = vpow.pop %v593
    %v595 = vadd.f32 %v594, 1.0
    %v596 = vrcp.pop %v595
    %v597 = vmul.f32 1.0, %v596
    %v598 = vtanh.pop %v591
    %v600 = vrot.slane %v500, 7
    %v602 = vmul.f32 %v597, %v600
    %604 = vrot.lane.b32.xlu0 %v598, 32
    %v605 = vpop.permute.xlu0 %604
    %v607 = vmul.f32 %v597, %v605
    %609 = vrot.lane.b32.xlu0 %v607, 32
    %v610 = vpop.permute.xlu0 %609
    %v612 = vadd.f32 %v602, %v610
    %v613 = vtanh.pop %v612
    %615 = vrot.lane.b32.xlu0 %v613, 32
    %v616 = vpop.permute.xlu0 %615
    %v618 = vmul.f32 %v597, %v616
    %620 = vrot.lane.b32.xlu0 %v618, 64
    %v621 = vpop.permute.xlu0 %620
    %vm623 = vcmask 257027
    %624 = vst.msk [vmem:[#allocation2] sm:$0x8] %vm623, %v621
    %v625 = vrot.slane %v618, 3
    %626 = vrot.lane.b32.xlu0 %v625, 64
    %v627 = vpop.permute.xlu0 %626
    %v628 = vsel %vm187, %v627, 0
    %630 = vmatprep.subr.mxu0 0.0
    %631 = vmatpush1.msra.mxu0 0.0
    %632 = vmatprep.subr.mxu0 0.0
    %633 = vmatpush1.msra.mxu0 0.0
    %634 = vmatprep.subr.mxu0 0.0
    %635 = vmatpush1.msra.mxu0 0.0
    %636 = vmatprep.subr.mxu0 0.0
    %637 = vmatpush1.msra.mxu0 0.0
    %638 = vmatprep.subr.mxu0 0.0
    %639 = vmatpush1.msra.mxu0 0.0
    %640 = vmatprep.subr.mxu0 0.0
    %641 = vmatpush1.msra.mxu0 0.0
    %642 = vmatprep.subr.mxu0 0.0
    %643 = vmatpush1.msra.mxu0 0.0
    %644 = vmatprep.subr.mxu0 0.0
    %645 = vmatpush1.msra.mxu0 0.0
    %646 = vmatprep.subr.mxu0 0.0
    %647 = vmatpush1.msra.mxu0 0.0
    %648 = vmatprep.subr.mxu0 0.0
    %649 = vmatpush1.msra.mxu0 0.0
    %650 = vmatprep.subr.mxu0 0.0
    %651 = vmatpush1.msra.mxu0 0.0
    %652 = vmatprep.subr.mxu0 0.0
    %653 = vmatpush1.msra.mxu0 0.0
    %654 = vmatprep.subr.mxu0 0.0
    %655 = vmatpush1.msra.mxu0 %v186
    %656 = vmatprep.subr.mxu0 0.0
    %657 = vmatpush1.msra.mxu0 %v185
    %658 = vmatprep.subr.mxu0 0.0
    %659 = vmatpush1.msra.mxu0 %v184
    %660 = vmatprep.subr.mxu0 0.0
    %661 = vmatpush1.msra.mxu0 %v183
    %662 = vmatprep.subr.mxu0 0.0
    %663 = vmatpush2.msra.mxu0 0.0
    %664 = vmatprep.subr.mxu0 0.0
    %665 = vmatpush2.msra.mxu0 0.0
    %666 = vmatprep.subr.mxu0 0.0
    %667 = vmatpush2.msra.mxu0 0.0
    %668 = vmatprep.subr.mxu0 0.0
    %669 = vmatpush2.msra.mxu0 0.0
    %670 = vmatprep.subr.mxu0 0.0
    %671 = vmatpush2.msra.mxu0 0.0
    %672 = vmatprep.subr.mxu0 0.0
    %673 = vmatpush2.msra.mxu0 0.0
    %674 = vmatprep.subr.mxu0 0.0
    %675 = vmatpush2.msra.mxu0 0.0
    %676 = vmatprep.subr.mxu0 0.0
    %677 = vmatpush2.msra.mxu0 0.0
    %678 = vmatprep.subr.mxu0 0.0
    %679 = vmatpush2.msra.mxu0 0.0
    %680 = vmatprep.subr.mxu0 0.0
    %681 = vmatpush2.msra.mxu0 0.0
    %682 = vmatprep.subr.mxu0 0.0
    %683 = vmatpush2.msra.mxu0 0.0
    %684 = vmatprep.subr.mxu0 0.0
    %685 = vmatpush2.msra.mxu0 0.0
    %686 = vmatprep.subr.mxu0 0.0
    %687 = vmatpush2.msra.mxu0 0.0
    %688 = vmatprep.subr.mxu0 0.0
    %689 = vmatpush2.msra.mxu0 0.0
    %690 = vmatprep.subr.mxu0 0.0
    %691 = vmatpush2.msra.mxu0 0.0
    %692 = vmatprep.subr.mxu0 0.0
    %693 = vmatpush2.msra.mxu0 0.0
    %694 = vmatprep.mubr.f32.mxu0 0.0
    %695 = vmatmul.mubr.f32.gmra.mxu0 %v628
    %v696 = vpop.f32.mrf.mxu0
    %v697 = vadd.f32 0.0, %v696
    %v698 = vpop.f32.mrf.mxu0
    %699 = vdwg.mxu0
    %v701 = vrot.slane %v697, 4
    %v703 = vadd.f32 %v180, %v701
    %v704 = vxor.u32 %v703, 2147483648
    %v705 = vmul.f32 %v704, 1.442695
    %v706 = vpow.pop %v705
    %v707 = vadd.f32 %v706, 1.0
    %v708 = vrcp.pop %v707
    %v709 = vmul.f32 1.0, %v708
    %v710 = vtanh.pop %v703
    %v712 = vrot.slane %v612, 7
    %v714 = vmul.f32 %v709, %v712
    %716 = vrot.lane.b32.xlu0 %v710, 32
    %v717 = vpop.permute.xlu0 %716
    %v719 = vmul.f32 %v709, %v717
    %721 = vrot.lane.b32.xlu0 %v719, 32
    %v722 = vpop.permute.xlu0 %721
    %v724 = vadd.f32 %v714, %v722
    %v725 = vtanh.pop %v724
    %727 = vrot.lane.b32.xlu0 %v725, 32
    %v728 = vpop.permute.xlu0 %727
    %v730 = vmul.f32 %v709, %v728
    %732 = vrot.lane.b32.xlu0 %v730, 64
    %v733 = vpop.permute.xlu0 %732
    %vm735 = vcmask 258052
    %736 = vst.msk [vmem:[#allocation2] sm:$0x10] %vm735, %v733
    %v737 = vrot.slane %v730, 4
    %738 = vrot.lane.b32.xlu0 %v737, 64
    %v739 = vpop.permute.xlu0 %738
    %v740 = vsel %vm187, %v739, 0
    %742 = vmatprep.subr.mxu0 0.0
    %743 = vmatpush1.msra.mxu0 0.0
    %744 = vmatprep.subr.mxu0 0.0
    %745 = vmatpush1.msra.mxu0 0.0
    %746 = vmatprep.subr.mxu0 0.0
    %747 = vmatpush1.msra.mxu0 0.0
    %748 = vmatprep.subr.mxu0 0.0
    %749 = vmatpush1.msra.mxu0 0.0
    %750 = vmatprep.subr.mxu0 0.0
    %751 = vmatpush1.msra.mxu0 0.0
    %752 = vmatprep.subr.mxu0 0.0
    %753 = vmatpush1.msra.mxu0 0.0
    %754 = vmatprep.subr.mxu0 0.0
    %755 = vmatpush1.msra.mxu0 0.0
    %756 = vmatprep.subr.mxu0 0.0
    %757 = vmatpush1.msra.mxu0 0.0
    %758 = vmatprep.subr.mxu0 0.0
    %759 = vmatpush1.msra.mxu0 0.0
    %760 = vmatprep.subr.mxu0 0.0
    %761 = vmatpush1.msra.mxu0 0.0
    %762 = vmatprep.subr.mxu0 0.0
    %763 = vmatpush1.msra.mxu0 0.0
    %764 = vmatprep.subr.mxu0 0.0
    %765 = vmatpush1.msra.mxu0 0.0
    %766 = vmatprep.subr.mxu0 0.0
    %767 = vmatpush1.msra.mxu0 %v186
    %768 = vmatprep.subr.mxu0 0.0
    %769 = vmatpush1.msra.mxu0 %v185
    %770 = vmatprep.subr.mxu0 0.0
    %771 = vmatpush1.msra.mxu0 %v184
    %772 = vmatprep.subr.mxu0 0.0
    %773 = vmatpush1.msra.mxu0 %v183
    %774 = vmatprep.subr.mxu0 0.0
    %775 = vmatpush2.msra.mxu0 0.0
    %776 = vmatprep.subr.mxu0 0.0
    %777 = vmatpush2.msra.mxu0 0.0
    %778 = vmatprep.subr.mxu0 0.0
    %779 = vmatpush2.msra.mxu0 0.0
    %780 = vmatprep.subr.mxu0 0.0
    %781 = vmatpush2.msra.mxu0 0.0
    %782 = vmatprep.subr.mxu0 0.0
    %783 = vmatpush2.msra.mxu0 0.0
    %784 = vmatprep.subr.mxu0 0.0
    %785 = vmatpush2.msra.mxu0 0.0
    %786 = vmatprep.subr.mxu0 0.0
    %787 = vmatpush2.msra.mxu0 0.0
    %788 = vmatprep.subr.mxu0 0.0
    %789 = vmatpush2.msra.mxu0 0.0
    %790 = vmatprep.subr.mxu0 0.0
    %791 = vmatpush2.msra.mxu0 0.0
    %792 = vmatprep.subr.mxu0 0.0
    %793 = vmatpush2.msra.mxu0 0.0
    %794 = vmatprep.subr.mxu0 0.0
    %795 = vmatpush2.msra.mxu0 0.0
    %796 = vmatprep.subr.mxu0 0.0
    %797 = vmatpush2.msra.mxu0 0.0
    %798 = vmatprep.subr.mxu0 0.0
    %799 = vmatpush2.msra.mxu0 0.0
    %800 = vmatprep.subr.mxu0 0.0
    %801 = vmatpush2.msra.mxu0 0.0
    %802 = vmatprep.subr.mxu0 0.0
    %803 = vmatpush2.msra.mxu0 0.0
    %804 = vmatprep.subr.mxu0 0.0
    %805 = vmatpush2.msra.mxu0 0.0
    %806 = vmatprep.mubr.f32.mxu0 0.0
    %807 = vmatmul.mubr.f32.gmra.mxu0 %v740
    %v808 = vpop.f32.mrf.mxu0
    %v809 = vadd.f32 0.0, %v808
    %v810 = vpop.f32.mrf.mxu0
    %811 = vdwg.mxu0
    %v813 = vrot.slane %v809, 3
    %v815 = vadd.f32 %v180, %v813
    %v816 = vxor.u32 %v815, 2147483648
    %v817 = vmul.f32 %v816, 1.442695
    %v818 = vpow.pop %v817
    %v819 = vadd.f32 %v818, 1.0
    %v820 = vrcp.pop %v819
    %v821 = vmul.f32 1.0, %v820
    %v822 = vtanh.pop %v815
    %v824 = vrot.slane %v724, 7
    %v826 = vmul.f32 %v821, %v824
    %828 = vrot.lane.b32.xlu0 %v822, 32
    %v829 = vpop.permute.xlu0 %828
    %v831 = vmul.f32 %v821, %v829
    %833 = vrot.lane.b32.xlu0 %v831, 32
    %v834 = vpop.permute.xlu0 %833
    %v836 = vadd.f32 %v826, %v834
    %v837 = vtanh.pop %v836
    %839 = vrot.lane.b32.xlu0 %v837, 32
    %v840 = vpop.permute.xlu0 %839
    %v842 = vmul.f32 %v821, %v840
    %844 = vrot.lane.b32.xlu0 %v842, 64
    %v845 = vpop.permute.xlu0 %844
    %vm847 = vcmask 259077
    %848 = vst.msk [vmem:[#allocation2] sm:$0x20] %vm847, %v845
    %v849 = vrot.slane %v842, 5
    %850 = vrot.lane.b32.xlu0 %v849, 64
    %v851 = vpop.permute.xlu0 %850
    %v852 = vsel %vm187, %v851, 0
    %854 = vmatprep.subr.mxu0 0.0
    %855 = vmatpush1.msra.mxu0 0.0
    %856 = vmatprep.subr.mxu0 0.0
    %857 = vmatpush1.msra.mxu0 0.0
    %858 = vmatprep.subr.mxu0 0.0
    %859 = vmatpush1.msra.mxu0 0.0
    %860 = vmatprep.subr.mxu0 0.0
    %861 = vmatpush1.msra.mxu0 0.0
    %862 = vmatprep.subr.mxu0 0.0
    %863 = vmatpush1.msra.mxu0 0.0
    %864 = vmatprep.subr.mxu0 0.0
    %865 = vmatpush1.msra.mxu0 0.0
    %866 = vmatprep.subr.mxu0 0.0
    %867 = vmatpush1.msra.mxu0 0.0
    %868 = vmatprep.subr.mxu0 0.0
    %869 = vmatpush1.msra.mxu0 0.0
    %870 = vmatprep.subr.mxu0 0.0
    %871 = vmatpush1.msra.mxu0 0.0
    %872 = vmatprep.subr.mxu0 0.0
    %873 = vmatpush1.msra.mxu0 0.0
    %874 = vmatprep.subr.mxu0 0.0
    %875 = vmatpush1.msra.mxu0 0.0
    %876 = vmatprep.subr.mxu0 0.0
    %877 = vmatpush1.msra.mxu0 0.0
    %878 = vmatprep.subr.mxu0 0.0
    %879 = vmatpush1.msra.mxu0 %v186
    %880 = vmatprep.subr.mxu0 0.0
    %881 = vmatpush1.msra.mxu0 %v185
    %882 = vmatprep.subr.mxu0 0.0
    %883 = vmatpush1.msra.mxu0 %v184
    %884 = vmatprep.subr.mxu0 0.0
    %885 = vmatpush1.msra.mxu0 %v183
    %886 = vmatprep.subr.mxu0 0.0
    %887 = vmatpush2.msra.mxu0 0.0
    %888 = vmatprep.subr.mxu0 0.0
    %889 = vmatpush2.msra.mxu0 0.0
    %890 = vmatprep.subr.mxu0 0.0
    %891 = vmatpush2.msra.mxu0 0.0
    %892 = vmatprep.subr.mxu0 0.0
    %893 = vmatpush2.msra.mxu0 0.0
    %894 = vmatprep.subr.mxu0 0.0
    %895 = vmatpush2.msra.mxu0 0.0
    %896 = vmatprep.subr.mxu0 0.0
    %897 = vmatpush2.msra.mxu0 0.0
    %898 = vmatprep.subr.mxu0 0.0
    %899 = vmatpush2.msra.mxu0 0.0
    %900 = vmatprep.subr.mxu0 0.0
    %901 = vmatpush2.msra.mxu0 0.0
    %902 = vmatprep.subr.mxu0 0.0
    %903 = vmatpush2.msra.mxu0 0.0
    %904 = vmatprep.subr.mxu0 0.0
    %905 = vmatpush2.msra.mxu0 0.0
    %906 = vmatprep.subr.mxu0 0.0
    %907 = vmatpush2.msra.mxu0 0.0
    %908 = vmatprep.subr.mxu0 0.0
    %909 = vmatpush2.msra.mxu0 0.0
    %910 = vmatprep.subr.mxu0 0.0
    %911 = vmatpush2.msra.mxu0 0.0
    %912 = vmatprep.subr.mxu0 0.0
    %913 = vmatpush2.msra.mxu0 0.0
    %914 = vmatprep.subr.mxu0 0.0
    %915 = vmatpush2.msra.mxu0 0.0
    %916 = vmatprep.subr.mxu0 0.0
    %917 = vmatpush2.msra.mxu0 0.0
    %918 = vmatprep.mubr.f32.mxu0 0.0
    %919 = vmatmul.mubr.f32.gmra.mxu0 %v852
    %v920 = vpop.f32.mrf.mxu0
    %v921 = vadd.f32 0.0, %v920
    %v922 = vpop.f32.mrf.mxu0
    %923 = vdwg.mxu0
    %v925 = vrot.slane %v921, 2
    %v927 = vadd.f32 %v180, %v925
    %v928 = vxor.u32 %v927, 2147483648
    %v929 = vmul.f32 %v928, 1.442695
    %v930 = vpow.pop %v929
    %v931 = vadd.f32 %v930, 1.0
    %v932 = vrcp.pop %v931
    %v933 = vmul.f32 1.0, %v932
    %v934 = vtanh.pop %v927
    %v936 = vrot.slane %v836, 7
    %v938 = vmul.f32 %v933, %v936
    %940 = vrot.lane.b32.xlu0 %v934, 32
    %v941 = vpop.permute.xlu0 %940
    %v943 = vmul.f32 %v933, %v941
    %945 = vrot.lane.b32.xlu0 %v943, 32
    %v946 = vpop.permute.xlu0 %945
    %v948 = vadd.f32 %v938, %v946
    %v949 = vtanh.pop %v948
    %951 = vrot.lane.b32.xlu0 %v949, 32
    %v952 = vpop.permute.xlu0 %951
    %v954 = vmul.f32 %v933, %v952
    %956 = vrot.lane.b32.xlu0 %v954, 64
    %v957 = vpop.permute.xlu0 %956
    %vm959 = vcmask 260102
    %960 = vst.msk [vmem:[#allocation2] sm:$0x40] %vm959, %v957
    %v961 = vrot.slane %v954, 6
    %962 = vrot.lane.b32.xlu0 %v961, 64
    %v963 = vpop.permute.xlu0 %962
    %v964 = vsel %vm187, %v963, 0
    %966 = vmatprep.subr.mxu0 0.0
    %967 = vmatpush1.msra.mxu0 0.0
    %968 = vmatprep.subr.mxu0 0.0
    %969 = vmatpush1.msra.mxu0 0.0
    %970 = vmatprep.subr.mxu0 0.0
    %971 = vmatpush1.msra.mxu0 0.0
    %972 = vmatprep.subr.mxu0 0.0
    %973 = vmatpush1.msra.mxu0 0.0
    %974 = vmatprep.subr.mxu0 0.0
    %975 = vmatpush1.msra.mxu0 0.0
    %976 = vmatprep.subr.mxu0 0.0
    %977 = vmatpush1.msra.mxu0 0.0
    %978 = vmatprep.subr.mxu0 0.0
    %979 = vmatpush1.msra.mxu0 0.0
    %980 = vmatprep.subr.mxu0 0.0
    %981 = vmatpush1.msra.mxu0 0.0
    %982 = vmatprep.subr.mxu0 0.0
    %983 = vmatpush1.msra.mxu0 0.0
    %984 = vmatprep.subr.mxu0 0.0
    %985 = vmatpush1.msra.mxu0 0.0
    %986 = vmatprep.subr.mxu0 0.0
    %987 = vmatpush1.msra.mxu0 0.0
    %988 = vmatprep.subr.mxu0 0.0
    %989 = vmatpush1.msra.mxu0 0.0
    %990 = vmatprep.subr.mxu0 0.0
    %991 = vmatpush1.msra.mxu0 %v186
    %992 = vmatprep.subr.mxu0 0.0
    %993 = vmatpush1.msra.mxu0 %v185
    %994 = vmatprep.subr.mxu0 0.0
    %995 = vmatpush1.msra.mxu0 %v184
    %996 = vmatprep.subr.mxu0 0.0
    %997 = vmatpush1.msra.mxu0 %v183
    %998 = vmatprep.subr.mxu0 0.0
    %999 = vmatpush2.msra.mxu0 0.0
    %1000 = vmatprep.subr.mxu0 0.0
    %1001 = vmatpush2.msra.mxu0 0.0
    %1002 = vmatprep.subr.mxu0 0.0
    %1003 = vmatpush2.msra.mxu0 0.0
    %1004 = vmatprep.subr.mxu0 0.0
    %1005 = vmatpush2.msra.mxu0 0.0
    %1006 = vmatprep.subr.mxu0 0.0
    %1007 = vmatpush2.msra.mxu0 0.0
    %1008 = vmatprep.subr.mxu0 0.0
    %1009 = vmatpush2.msra.mxu0 0.0
    %1010 = vmatprep.subr.mxu0 0.0
    %1011 = vmatpush2.msra.mxu0 0.0
    %1012 = vmatprep.subr.mxu0 0.0
    %1013 = vmatpush2.msra.mxu0 0.0
    %1014 = vmatprep.subr.mxu0 0.0
    %1015 = vmatpush2.msra.mxu0 0.0
    %1016 = vmatprep.subr.mxu0 0.0
    %1017 = vmatpush2.msra.mxu0 0.0
    %1018 = vmatprep.subr.mxu0 0.0
    %1019 = vmatpush2.msra.mxu0 0.0
    %1020 = vmatprep.subr.mxu0 0.0
    %1021 = vmatpush2.msra.mxu0 0.0
    %1022 = vmatprep.subr.mxu0 0.0
    %1023 = vmatpush2.msra.mxu0 0.0
    %1024 = vmatprep.subr.mxu0 0.0
    %1025 = vmatpush2.msra.mxu0 0.0
    %1026 = vmatprep.subr.mxu0 0.0
    %1027 = vmatpush2.msra.mxu0 0.0
    %1028 = vmatprep.subr.mxu0 0.0
    %1029 = vmatpush2.msra.mxu0 0.0
    %1030 = vmatprep.mubr.f32.mxu0 0.0
    %1031 = vmatmul.mubr.f32.gmra.mxu0 %v964
    %v1032 = vpop.f32.mrf.mxu0
    %v1033 = vadd.f32 0.0, %v1032
    %v1034 = vpop.f32.mrf.mxu0
    %1035 = vdwg.mxu0
    %v1037 = vrot.slane %v1033, 1
    %v1039 = vadd.f32 %v180, %v1037
    %v1040 = vxor.u32 %v1039, 2147483648
    %v1041 = vmul.f32 %v1040, 1.442695
    %v1042 = vpow.pop %v1041
    %v1043 = vadd.f32 %v1042, 1.0
    %v1044 = vrcp.pop %v1043
    %v1045 = vmul.f32 1.0, %v1044
    %v1046 = vtanh.pop %v1039
    %v1048 = vrot.slane %v948, 7
    %v1050 = vmul.f32 %v1045, %v1048
    %1052 = vrot.lane.b32.xlu0 %v1046, 32
    %v1053 = vpop.permute.xlu0 %1052
    %v1055 = vmul.f32 %v1045, %v1053
    %1057 = vrot.lane.b32.xlu0 %v1055, 32
    %v1058 = vpop.permute.xlu0 %1057
    %v1060 = vadd.f32 %v1050, %v1058
    %v1061 = vtanh.pop %v1060
    %1063 = vrot.lane.b32.xlu0 %v1061, 32
    %v1064 = vpop.permute.xlu0 %1063
    %v1066 = vmul.f32 %v1045, %v1064
    %1068 = vrot.lane.b32.xlu0 %v1066, 64
    %v1069 = vpop.permute.xlu0 %1068
    %vm1071 = vcmask 261127
    %1072 = vst.msk [vmem:[#allocation2] sm:$0x80] %vm1071, %v1069
    %v1073 = vld [vmem:[#allocation2] sm:$0xff]
    %v1074 = vld [vmem:[%s4] sm:$0xff]
    %v1075 = vld [vmem:[%s4 + $0x8] sm:$0xff]
    %v1076 = vld [vmem:[%s4 + $0x10] sm:$0xff]
    %v1077 = vld [vmem:[%s4 + $0x18] sm:$0xff]
    %v1078 = vld [vmem:[#allocation9] sm:$0x1]
    %v1080 = vlaneseq
    %v1081 = vshrl.u32 %v1080, 7
    %v1082 = vsub.s32 0, %v1081
    %v1083 = vrot.slane %v1078, %v1082
    %v1086 = vsel %vm187, %v1073, 0
    %1088 = vmatprep.subr.mxu0 0.0
    %1089 = vmatpush1.msra.mxu0 0.0
    %1090 = vmatprep.subr.mxu0 0.0
    %1091 = vmatpush1.msra.mxu0 0.0
    %1092 = vmatprep.subr.mxu0 0.0
    %1093 = vmatpush1.msra.mxu0 0.0
    %1094 = vmatprep.subr.mxu0 0.0
    %1095 = vmatpush1.msra.mxu0 0.0
    %1096 = vmatprep.subr.mxu0 0.0
    %1097 = vmatpush1.msra.mxu0 0.0
    %1098 = vmatprep.subr.mxu0 0.0
    %1099 = vmatpush1.msra.mxu0 0.0
    %1100 = vmatprep.subr.mxu0 0.0
    %1101 = vmatpush1.msra.mxu0 0.0
    %1102 = vmatprep.subr.mxu0 0.0
    %1103 = vmatpush1.msra.mxu0 0.0
    %1104 = vmatprep.subr.mxu0 0.0
    %1105 = vmatpush1.msra.mxu0 0.0
    %1106 = vmatprep.subr.mxu0 0.0
    %1107 = vmatpush1.msra.mxu0 0.0
    %1108 = vmatprep.subr.mxu0 0.0
    %1109 = vmatpush1.msra.mxu0 0.0
    %1110 = vmatprep.subr.mxu0 0.0
    %1111 = vmatpush1.msra.mxu0 0.0
    %1112 = vmatprep.subr.mxu0 0.0
    %1113 = vmatpush1.msra.mxu0 %v1077
    %1114 = vmatprep.subr.mxu0 0.0
    %1115 = vmatpush1.msra.mxu0 %v1076
    %1116 = vmatprep.subr.mxu0 0.0
    %1117 = vmatpush1.msra.mxu0 %v1075
    %1118 = vmatprep.subr.mxu0 0.0
    %1119 = vmatpush1.msra.mxu0 %v1074
    %1120 = vmatprep.subr.mxu0 0.0
    %1121 = vmatpush2.msra.mxu0 0.0
    %1122 = vmatprep.subr.mxu0 0.0
    %1123 = vmatpush2.msra.mxu0 0.0
    %1124 = vmatprep.subr.mxu0 0.0
    %1125 = vmatpush2.msra.mxu0 0.0
    %1126 = vmatprep.subr.mxu0 0.0
    %1127 = vmatpush2.msra.mxu0 0.0
    %1128 = vmatprep.subr.mxu0 0.0
    %1129 = vmatpush2.msra.mxu0 0.0
    %1130 = vmatprep.subr.mxu0 0.0
    %1131 = vmatpush2.msra.mxu0 0.0
    %1132 = vmatprep.subr.mxu0 0.0
    %1133 = vmatpush2.msra.mxu0 0.0
    %1134 = vmatprep.subr.mxu0 0.0
    %1135 = vmatpush2.msra.mxu0 0.0
    %1136 = vmatprep.subr.mxu0 0.0
    %1137 = vmatpush2.msra.mxu0 0.0
    %1138 = vmatprep.subr.mxu0 0.0
    %1139 = vmatpush2.msra.mxu0 0.0
    %1140 = vmatprep.subr.mxu0 0.0
    %1141 = vmatpush2.msra.mxu0 0.0
    %1142 = vmatprep.subr.mxu0 0.0
    %1143 = vmatpush2.msra.mxu0 0.0
    %1144 = vmatprep.subr.mxu0 0.0
    %1145 = vmatpush2.msra.mxu0 0.0
    %1146 = vmatprep.subr.mxu0 0.0
    %1147 = vmatpush2.msra.mxu0 0.0
    %1148 = vmatprep.subr.mxu0 0.0
    %1149 = vmatpush2.msra.mxu0 0.0
    %1150 = vmatprep.subr.mxu0 0.0
    %1151 = vmatpush2.msra.mxu0 0.0
    %1152 = vmatprep.mubr.f32.mxu0 0.0
    %1153 = vmatmul.mubr.f32.gmra.mxu0 %v1086
    %v1154 = vpop.f32.mrf.mxu0
    %v1155 = vadd.f32 %v1083, %v1154
    %v1156 = vpop.f32.mrf.mxu0
    %1157 = vdwg.mxu0
    %v1158 = vld [vmem:[#allocation8] sm:$0xff]
    %v1159 = vld [vmem:[#allocation8 + $0x8] sm:$0xff]
    %v1160 = vld [vmem:[#allocation8 + $0x10] sm:$0xff]
    %v1161 = vld [vmem:[#allocation8 + $0x18] sm:$0xff]
    %1162 = vmatprep.subr.mxu0 0.0
    %1163 = vmatpush1.msra.mxu0 0.0
    %1164 = vmatprep.subr.mxu0 0.0
    %1165 = vmatpush1.msra.mxu0 0.0
    %1166 = vmatprep.subr.mxu0 0.0
    %1167 = vmatpush1.msra.mxu0 0.0
    %1168 = vmatprep.subr.mxu0 0.0
    %1169 = vmatpush1.msra.mxu0 0.0
    %1170 = vmatprep.subr.mxu0 0.0
    %1171 = vmatpush1.msra.mxu0 0.0
    %1172 = vmatprep.subr.mxu0 0.0
    %1173 = vmatpush1.msra.mxu0 0.0
    %1174 = vmatprep.subr.mxu0 0.0
    %1175 = vmatpush1.msra.mxu0 0.0
    %1176 = vmatprep.subr.mxu0 0.0
    %1177 = vmatpush1.msra.mxu0 0.0
    %1178 = vmatprep.subr.mxu0 0.0
    %1179 = vmatpush1.msra.mxu0 0.0
    %1180 = vmatprep.subr.mxu0 0.0
    %1181 = vmatpush1.msra.mxu0 0.0
    %1182 = vmatprep.subr.mxu0 0.0
    %1183 = vmatpush1.msra.mxu0 0.0
    %1184 = vmatprep.subr.mxu0 0.0
    %1185 = vmatpush1.msra.mxu0 0.0
    %1186 = vmatprep.subr.mxu0 0.0
    %1187 = vmatpush1.msra.mxu0 %v1161
    %1188 = vmatprep.subr.mxu0 0.0
    %1189 = vmatpush1.msra.mxu0 %v1160
    %1190 = vmatprep.subr.mxu0 0.0
    %1191 = vmatpush1.msra.mxu0 %v1159
    %1192 = vmatprep.subr.mxu0 0.0
    %1193 = vmatpush1.msra.mxu0 %v1158
    %1194 = vmatprep.subr.mxu0 0.0
    %1195 = vmatpush2.msra.mxu0 0.0
    %1196 = vmatprep.subr.mxu0 0.0
    %1197 = vmatpush2.msra.mxu0 0.0
    %1198 = vmatprep.subr.mxu0 0.0
    %1199 = vmatpush2.msra.mxu0 0.0
    %1200 = vmatprep.subr.mxu0 0.0
    %1201 = vmatpush2.msra.mxu0 0.0
    %1202 = vmatprep.subr.mxu0 0.0
    %1203 = vmatpush2.msra.mxu0 0.0
    %1204 = vmatprep.subr.mxu0 0.0
    %1205 = vmatpush2.msra.mxu0 0.0
    %1206 = vmatprep.subr.mxu0 0.0
    %1207 = vmatpush2.msra.mxu0 0.0
    %1208 = vmatprep.subr.mxu0 0.0
    %1209 = vmatpush2.msra.mxu0 0.0
    %1210 = vmatprep.subr.mxu0 0.0
    %1211 = vmatpush2.msra.mxu0 0.0
    %1212 = vmatprep.subr.mxu0 0.0
    %1213 = vmatpush2.msra.mxu0 0.0
    %1214 = vmatprep.subr.mxu0 0.0
    %1215 = vmatpush2.msra.mxu0 0.0
    %1216 = vmatprep.subr.mxu0 0.0
    %1217 = vmatpush2.msra.mxu0 0.0
    %1218 = vmatprep.subr.mxu0 0.0
    %1219 = vmatpush2.msra.mxu0 0.0
    %1220 = vmatprep.subr.mxu0 0.0
    %1221 = vmatpush2.msra.mxu0 0.0
    %1222 = vmatprep.subr.mxu0 0.0
    %1223 = vmatpush2.msra.mxu0 0.0
    %1224 = vmatprep.subr.mxu0 0.0
    %1225 = vmatpush2.msra.mxu0 0.0
    %1226 = vmatprep.mubr.f32.mxu0 0.0
    %1227 = vmatmul.mubr.f32.gmra.mxu0 %v189
    %v1228 = vpop.f32.mrf.mxu0
    %v1229 = vadd.f32 0.0, %v1228
    %v1230 = vpop.f32.mrf.mxu0
    %1231 = vdwg.mxu0
    %v1232 = vadd.f32 %v1155, %v1229
    %v1233 = vxor.u32 %v1232, 2147483648
    %v1234 = vmul.f32 %v1233, 1.442695
    %v1235 = vpow.pop %v1234
    %v1236 = vadd.f32 %v1235, 1.0
    %v1237 = vrcp.pop %v1236
    %v1238 = vmul.f32 1.0, %v1237
    %v1239 = vtanh.pop %v1232
    %v1240 = vmul.f32 %v1238, 0.0
    %1242 = vrot.lane.b32.xlu0 %v1239, 32
    %v1243 = vpop.permute.xlu0 %1242
    %v1245 = vmul.f32 %v1238, %v1243
    %1247 = vrot.lane.b32.xlu0 %v1245, 32
    %v1248 = vpop.permute.xlu0 %1247
    %v1250 = vadd.f32 %v1240, %v1248
    %v1251 = vtanh.pop %v1250
    %1253 = vrot.lane.b32.xlu0 %v1251, 32
    %v1254 = vpop.permute.xlu0 %1253
    %v1256 = vmul.f32 %v1238, %v1254
    %1258 = vrot.lane.b32.xlu0 %v1256, 64
    %v1259 = vpop.permute.xlu0 %1258
    %1261 = vst.msk [vmem:[#allocation2] sm:$0x1] %vm290, %v1259
    %v1262 = vsel %vm187, %v1259, 0
    %1264 = vmatprep.subr.mxu0 0.0
    %1265 = vmatpush1.msra.mxu0 0.0
    %1266 = vmatprep.subr.mxu0 0.0
    %1267 = vmatpush1.msra.mxu0 0.0
    %1268 = vmatprep.subr.mxu0 0.0
    %1269 = vmatpush1.msra.mxu0 0.0
    %1270 = vmatprep.subr.mxu0 0.0
    %1271 = vmatpush1.msra.mxu0 0.0
    %1272 = vmatprep.subr.mxu0 0.0
    %1273 = vmatpush1.msra.mxu0 0.0
    %1274 = vmatprep.subr.mxu0 0.0
    %1275 = vmatpush1.msra.mxu0 0.0
    %1276 = vmatprep.subr.mxu0 0.0
    %1277 = vmatpush1.msra.mxu0 0.0
    %1278 = vmatprep.subr.mxu0 0.0
    %1279 = vmatpush1.msra.mxu0 0.0
    %1280 = vmatprep.subr.mxu0 0.0
    %1281 = vmatpush1.msra.mxu0 0.0
    %1282 = vmatprep.subr.mxu0 0.0
    %1283 = vmatpush1.msra.mxu0 0.0
    %1284 = vmatprep.subr.mxu0 0.0
    %1285 = vmatpush1.msra.mxu0 0.0
    %1286 = vmatprep.subr.mxu0 0.0
    %1287 = vmatpush1.msra.mxu0 0.0
    %1288 = vmatprep.subr.mxu0 0.0
    %1289 = vmatpush1.msra.mxu0 %v1161
    %1290 = vmatprep.subr.mxu0 0.0
    %1291 = vmatpush1.msra.mxu0 %v1160
    %1292 = vmatprep.subr.mxu0 0.0
    %1293 = vmatpush1.msra.mxu0 %v1159
    %1294 = vmatprep.subr.mxu0 0.0
    %1295 = vmatpush1.msra.mxu0 %v1158
    %1296 = vmatprep.subr.mxu0 0.0
    %1297 = vmatpush2.msra.mxu0 0.0
    %1298 = vmatprep.subr.mxu0 0.0
    %1299 = vmatpush2.msra.mxu0 0.0
    %1300 = vmatprep.subr.mxu0 0.0
    %1301 = vmatpush2.msra.mxu0 0.0
    %1302 = vmatprep.subr.mxu0 0.0
    %1303 = vmatpush2.msra.mxu0 0.0
    %1304 = vmatprep.subr.mxu0 0.0
    %1305 = vmatpush2.msra.mxu0 0.0
    %1306 = vmatprep.subr.mxu0 0.0
    %1307 = vmatpush2.msra.mxu0 0.0
    %1308 = vmatprep.subr.mxu0 0.0
    %1309 = vmatpush2.msra.mxu0 0.0
    %1310 = vmatprep.subr.mxu0 0.0
    %1311 = vmatpush2.msra.mxu0 0.0
    %1312 = vmatprep.subr.mxu0 0.0
    %1313 = vmatpush2.msra.mxu0 0.0
    %1314 = vmatprep.subr.mxu0 0.0
    %1315 = vmatpush2.msra.mxu0 0.0
    %1316 = vmatprep.subr.mxu0 0.0
    %1317 = vmatpush2.msra.mxu0 0.0
    %1318 = vmatprep.subr.mxu0 0.0
    %1319 = vmatpush2.msra.mxu0 0.0
    %1320 = vmatprep.subr.mxu0 0.0
    %1321 = vmatpush2.msra.mxu0 0.0
    %1322 = vmatprep.subr.mxu0 0.0
    %1323 = vmatpush2.msra.mxu0 0.0
    %1324 = vmatprep.subr.mxu0 0.0
    %1325 = vmatpush2.msra.mxu0 0.0
    %1326 = vmatprep.subr.mxu0 0.0
    %1327 = vmatpush2.msra.mxu0 0.0
    %1328 = vmatprep.mubr.f32.mxu0 0.0
    %1329 = vmatmul.mubr.f32.gmra.mxu0 %v1262
    %v1330 = vpop.f32.mrf.mxu0
    %v1331 = vadd.f32 0.0, %v1330
    %v1332 = vpop.f32.mrf.mxu0
    %1333 = vdwg.mxu0
    %v1335 = vrot.slane %v1331, 7
    %v1337 = vadd.f32 %v1155, %v1335
    %v1338 = vxor.u32 %v1337, 2147483648
    %v1339 = vmul.f32 %v1338, 1.442695
    %v1340 = vpow.pop %v1339
    %v1341 = vadd.f32 %v1340, 1.0
    %v1342 = vrcp.pop %v1341
    %v1343 = vmul.f32 1.0, %v1342
    %v1344 = vtanh.pop %v1337
    %v1346 = vrot.slane %v1250, 7
    %v1348 = vmul.f32 %v1343, %v1346
    %1350 = vrot.lane.b32.xlu0 %v1344, 32
    %v1351 = vpop.permute.xlu0 %1350
    %v1353 = vmul.f32 %v1343, %v1351
    %1355 = vrot.lane.b32.xlu0 %v1353, 32
    %v1356 = vpop.permute.xlu0 %1355
    %v1358 = vadd.f32 %v1348, %v1356
    %v1359 = vtanh.pop %v1358
    %1361 = vrot.lane.b32.xlu0 %v1359, 32
    %v1362 = vpop.permute.xlu0 %1361
    %v1364 = vmul.f32 %v1343, %v1362
    %1366 = vrot.lane.b32.xlu0 %v1364, 64
    %v1367 = vpop.permute.xlu0 %1366
    %1369 = vst.msk [vmem:[#allocation2] sm:$0x2] %vm399, %v1367
    %v1370 = vrot.slane %v1364, 1
    %1371 = vrot.lane.b32.xlu0 %v1370, 64
    %v1372 = vpop.permute.xlu0 %1371
    %v1373 = vsel %vm187, %v1372, 0
    %1375 = vmatprep.subr.mxu0 0.0
    %1376 = vmatpush1.msra.mxu0 0.0
    %1377 = vmatprep.subr.mxu0 0.0
    %1378 = vmatpush1.msra.mxu0 0.0
    %1379 = vmatprep.subr.mxu0 0.0
    %1380 = vmatpush1.msra.mxu0 0.0
    %1381 = vmatprep.subr.mxu0 0.0
    %1382 = vmatpush1.msra.mxu0 0.0
    %1383 = vmatprep.subr.mxu0 0.0
    %1384 = vmatpush1.msra.mxu0 0.0
    %1385 = vmatprep.subr.mxu0 0.0
    %1386 = vmatpush1.msra.mxu0 0.0
    %1387 = vmatprep.subr.mxu0 0.0
    %1388 = vmatpush1.msra.mxu0 0.0
    %1389 = vmatprep.subr.mxu0 0.0
    %1390 = vmatpush1.msra.mxu0 0.0
    %1391 = vmatprep.subr.mxu0 0.0
    %1392 = vmatpush1.msra.mxu0 0.0
    %1393 = vmatprep.subr.mxu0 0.0
    %1394 = vmatpush1.msra.mxu0 0.0
    %1395 = vmatprep.subr.mxu0 0.0
    %1396 = vmatpush1.msra.mxu0 0.0
    %1397 = vmatprep.subr.mxu0 0.0
    %1398 = vmatpush1.msra.mxu0 0.0
    %1399 = vmatprep.subr.mxu0 0.0
    %1400 = vmatpush1.msra.mxu0 %v1161
    %1401 = vmatprep.subr.mxu0 0.0
    %1402 = vmatpush1.msra.mxu0 %v1160
    %1403 = vmatprep.subr.mxu0 0.0
    %1404 = vmatpush1.msra.mxu0 %v1159
    %1405 = vmatprep.subr.mxu0 0.0
    %1406 = vmatpush1.msra.mxu0 %v1158
    %1407 = vmatprep.subr.mxu0 0.0
    %1408 = vmatpush2.msra.mxu0 0.0
    %1409 = vmatprep.subr.mxu0 0.0
    %1410 = vmatpush2.msra.mxu0 0.0
    %1411 = vmatprep.subr.mxu0 0.0
    %1412 = vmatpush2.msra.mxu0 0.0
    %1413 = vmatprep.subr.mxu0 0.0
    %1414 = vmatpush2.msra.mxu0 0.0
    %1415 = vmatprep.subr.mxu0 0.0
    %1416 = vmatpush2.msra.mxu0 0.0
    %1417 = vmatprep.subr.mxu0 0.0
    %1418 = vmatpush2.msra.mxu0 0.0
    %1419 = vmatprep.subr.mxu0 0.0
    %1420 = vmatpush2.msra.mxu0 0.0
    %1421 = vmatprep.subr.mxu0 0.0
    %1422 = vmatpush2.msra.mxu0 0.0
    %1423 = vmatprep.subr.mxu0 0.0
    %1424 = vmatpush2.msra.mxu0 0.0
    %1425 = vmatprep.subr.mxu0 0.0
    %1426 = vmatpush2.msra.mxu0 0.0
    %1427 = vmatprep.subr.mxu0 0.0
    %1428 = vmatpush2.msra.mxu0 0.0
    %1429 = vmatprep.subr.mxu0 0.0
    %1430 = vmatpush2.msra.mxu0 0.0
    %1431 = vmatprep.subr.mxu0 0.0
    %1432 = vmatpush2.msra.mxu0 0.0
    %1433 = vmatprep.subr.mxu0 0.0
    %1434 = vmatpush2.msra.mxu0 0.0
    %1435 = vmatprep.subr.mxu0 0.0
    %1436 = vmatpush2.msra.mxu0 0.0
    %1437 = vmatprep.subr.mxu0 0.0
    %1438 = vmatpush2.msra.mxu0 0.0
    %1439 = vmatprep.mubr.f32.mxu0 0.0
    %1440 = vmatmul.mubr.f32.gmra.mxu0 %v1373
    %v1441 = vpop.f32.mrf.mxu0
    %v1442 = vadd.f32 0.0, %v1441
    %v1443 = vpop.f32.mrf.mxu0
    %1444 = vdwg.mxu0
    %v1446 = vrot.slane %v1442, 6
    %v1448 = vadd.f32 %v1155, %v1446
    %v1449 = vxor.u32 %v1448, 2147483648
    %v1450 = vmul.f32 %v1449, 1.442695
    %v1451 = vpow.pop %v1450
    %v1452 = vadd.f32 %v1451, 1.0
    %v1453 = vrcp.pop %v1452
    %v1454 = vmul.f32 1.0, %v1453
    %v1455 = vtanh.pop %v1448
    %v1457 = vrot.slane %v1358, 7
    %v1459 = vmul.f32 %v1454, %v1457
    %1461 = vrot.lane.b32.xlu0 %v1455, 32
    %v1462 = vpop.permute.xlu0 %1461
    %v1464 = vmul.f32 %v1454, %v1462
    %1466 = vrot.lane.b32.xlu0 %v1464, 32
    %v1467 = vpop.permute.xlu0 %1466
    %v1469 = vadd.f32 %v1459, %v1467
    %v1470 = vtanh.pop %v1469
    %1472 = vrot.lane.b32.xlu0 %v1470, 32
    %v1473 = vpop.permute.xlu0 %1472
    %v1475 = vmul.f32 %v1454, %v1473
    %1477 = vrot.lane.b32.xlu0 %v1475, 64
    %v1478 = vpop.permute.xlu0 %1477
    %1480 = vst.msk [vmem:[#allocation2] sm:$0x4] %vm511, %v1478
    %v1481 = vrot.slane %v1475, 2
    %1482 = vrot.lane.b32.xlu0 %v1481, 64
    %v1483 = vpop.permute.xlu0 %1482
    %v1484 = vsel %vm187, %v1483, 0
    %1486 = vmatprep.subr.mxu0 0.0
    %1487 = vmatpush1.msra.mxu0 0.0
    %1488 = vmatprep.subr.mxu0 0.0
    %1489 = vmatpush1.msra.mxu0 0.0
    %1490 = vmatprep.subr.mxu0 0.0
    %1491 = vmatpush1.msra.mxu0 0.0
    %1492 = vmatprep.subr.mxu0 0.0
    %1493 = vmatpush1.msra.mxu0 0.0
    %1494 = vmatprep.subr.mxu0 0.0
    %1495 = vmatpush1.msra.mxu0 0.0
    %1496 = vmatprep.subr.mxu0 0.0
    %1497 = vmatpush1.msra.mxu0 0.0
    %1498 = vmatprep.subr.mxu0 0.0
    %1499 = vmatpush1.msra.mxu0 0.0
    %1500 = vmatprep.subr.mxu0 0.0
    %1501 = vmatpush1.msra.mxu0 0.0
    %1502 = vmatprep.subr.mxu0 0.0
    %1503 = vmatpush1.msra.mxu0 0.0
    %1504 = vmatprep.subr.mxu0 0.0
    %1505 = vmatpush1.msra.mxu0 0.0
    %1506 = vmatprep.subr.mxu0 0.0
    %1507 = vmatpush1.msra.mxu0 0.0
    %1508 = vmatprep.subr.mxu0 0.0
    %1509 = vmatpush1.msra.mxu0 0.0
    %1510 = vmatprep.subr.mxu0 0.0
    %1511 = vmatpush1.msra.mxu0 %v1161
    %1512 = vmatprep.subr.mxu0 0.0
    %1513 = vmatpush1.msra.mxu0 %v1160
    %1514 = vmatprep.subr.mxu0 0.0
    %1515 = vmatpush1.msra.mxu0 %v1159
    %1516 = vmatprep.subr.mxu0 0.0
    %1517 = vmatpush1.msra.mxu0 %v1158
    %1518 = vmatprep.subr.mxu0 0.0
    %1519 = vmatpush2.msra.mxu0 0.0
    %1520 = vmatprep.subr.mxu0 0.0
    %1521 = vmatpush2.msra.mxu0 0.0
    %1522 = vmatprep.subr.mxu0 0.0
    %1523 = vmatpush2.msra.mxu0 0.0
    %1524 = vmatprep.subr.mxu0 0.0
    %1525 = vmatpush2.msra.mxu0 0.0
    %1526 = vmatprep.subr.mxu0 0.0
    %1527 = vmatpush2.msra.mxu0 0.0
    %1528 = vmatprep.subr.mxu0 0.0
    %1529 = vmatpush2.msra.mxu0 0.0
    %1530 = vmatprep.subr.mxu0 0.0
    %1531 = vmatpush2.msra.mxu0 0.0
    %1532 = vmatprep.subr.mxu0 0.0
    %1533 = vmatpush2.msra.mxu0 0.0
    %1534 = vmatprep.subr.mxu0 0.0
    %1535 = vmatpush2.msra.mxu0 0.0
    %1536 = vmatprep.subr.mxu0 0.0
    %1537 = vmatpush2.msra.mxu0 0.0
    %1538 = vmatprep.subr.mxu0 0.0
    %1539 = vmatpush2.msra.mxu0 0.0
    %1540 = vmatprep.subr.mxu0 0.0
    %1541 = vmatpush2.msra.mxu0 0.0
    %1542 = vmatprep.subr.mxu0 0.0
    %1543 = vmatpush2.msra.mxu0 0.0
    %1544 = vmatprep.subr.mxu0 0.0
    %1545 = vmatpush2.msra.mxu0 0.0
    %1546 = vmatprep.subr.mxu0 0.0
    %1547 = vmatpush2.msra.mxu0 0.0
    %1548 = vmatprep.subr.mxu0 0.0
    %1549 = vmatpush2.msra.mxu0 0.0
    %1550 = vmatprep.mubr.f32.mxu0 0.0
    %1551 = vmatmul.mubr.f32.gmra.mxu0 %v1484
    %v1552 = vpop.f32.mrf.mxu0
    %v1553 = vadd.f32 0.0, %v1552
    %v1554 = vpop.f32.mrf.mxu0
    %1555 = vdwg.mxu0
    %v1557 = vrot.slane %v1553, 5
    %v1559 = vadd.f32 %v1155, %v1557
    %v1560 = vxor.u32 %v1559, 2147483648
    %v1561 = vmul.f32 %v1560, 1.442695
    %v1562 = vpow.pop %v1561
    %v1563 = vadd.f32 %v1562, 1.0
    %v1564 = vrcp.pop %v1563
    %v1565 = vmul.f32 1.0, %v1564
    %v1566 = vtanh.pop %v1559
    %v1568 = vrot.slane %v1469, 7
    %v1570 = vmul.f32 %v1565, %v1568
    %1572 = vrot.lane.b32.xlu0 %v1566, 32
    %v1573 = vpop.permute.xlu0 %1572
    %v1575 = vmul.f32 %v1565, %v1573
    %1577 = vrot.lane.b32.xlu0 %v1575, 32
    %v1578 = vpop.permute.xlu0 %1577
    %v1580 = vadd.f32 %v1570, %v1578
    %v1581 = vtanh.pop %v1580
    %1583 = vrot.lane.b32.xlu0 %v1581, 32
    %v1584 = vpop.permute.xlu0 %1583
    %v1586 = vmul.f32 %v1565, %v1584
    %1588 = vrot.lane.b32.xlu0 %v1586, 64
    %v1589 = vpop.permute.xlu0 %1588
    %1591 = vst.msk [vmem:[#allocation2] sm:$0x8] %vm623, %v1589
    %v1592 = vrot.slane %v1586, 3
    %1593 = vrot.lane.b32.xlu0 %v1592, 64
    %v1594 = vpop.permute.xlu0 %1593
    %v1595 = vsel %vm187, %v1594, 0
    %1597 = vmatprep.subr.mxu0 0.0
    %1598 = vmatpush1.msra.mxu0 0.0
    %1599 = vmatprep.subr.mxu0 0.0
    %1600 = vmatpush1.msra.mxu0 0.0
    %1601 = vmatprep.subr.mxu0 0.0
    %1602 = vmatpush1.msra.mxu0 0.0
    %1603 = vmatprep.subr.mxu0 0.0
    %1604 = vmatpush1.msra.mxu0 0.0
    %1605 = vmatprep.subr.mxu0 0.0
    %1606 = vmatpush1.msra.mxu0 0.0
    %1607 = vmatprep.subr.mxu0 0.0
    %1608 = vmatpush1.msra.mxu0 0.0
    %1609 = vmatprep.subr.mxu0 0.0
    %1610 = vmatpush1.msra.mxu0 0.0
    %1611 = vmatprep.subr.mxu0 0.0
    %1612 = vmatpush1.msra.mxu0 0.0
    %1613 = vmatprep.subr.mxu0 0.0
    %1614 = vmatpush1.msra.mxu0 0.0
    %1615 = vmatprep.subr.mxu0 0.0
    %1616 = vmatpush1.msra.mxu0 0.0
    %1617 = vmatprep.subr.mxu0 0.0
    %1618 = vmatpush1.msra.mxu0 0.0
    %1619 = vmatprep.subr.mxu0 0.0
    %1620 = vmatpush1.msra.mxu0 0.0
    %1621 = vmatprep.subr.mxu0 0.0
    %1622 = vmatpush1.msra.mxu0 %v1161
    %1623 = vmatprep.subr.mxu0 0.0
    %1624 = vmatpush1.msra.mxu0 %v1160
    %1625 = vmatprep.subr.mxu0 0.0
    %1626 = vmatpush1.msra.mxu0 %v1159
    %1627 = vmatprep.subr.mxu0 0.0
    %1628 = vmatpush1.msra.mxu0 %v1158
    %1629 = vmatprep.subr.mxu0 0.0
    %1630 = vmatpush2.msra.mxu0 0.0
    %1631 = vmatprep.subr.mxu0 0.0
    %1632 = vmatpush2.msra.mxu0 0.0
    %1633 = vmatprep.subr.mxu0 0.0
    %1634 = vmatpush2.msra.mxu0 0.0
    %1635 = vmatprep.subr.mxu0 0.0
    %1636 = vmatpush2.msra.mxu0 0.0
    %1637 = vmatprep.subr.mxu0 0.0
    %1638 = vmatpush2.msra.mxu0 0.0
    %1639 = vmatprep.subr.mxu0 0.0
    %1640 = vmatpush2.msra.mxu0 0.0
    %1641 = vmatprep.subr.mxu0 0.0
    %1642 = vmatpush2.msra.mxu0 0.0
    %1643 = vmatprep.subr.mxu0 0.0
    %1644 = vmatpush2.msra.mxu0 0.0
    %1645 = vmatprep.subr.mxu0 0.0
    %1646 = vmatpush2.msra.mxu0 0.0
    %1647 = vmatprep.subr.mxu0 0.0
    %1648 = vmatpush2.msra.mxu0 0.0
    %1649 = vmatprep.subr.mxu0 0.0
    %1650 = vmatpush2.msra.mxu0 0.0
    %1651 = vmatprep.subr.mxu0 0.0
    %1652 = vmatpush2.msra.mxu0 0.0
    %1653 = vmatprep.subr.mxu0 0.0
    %1654 = vmatpush2.msra.mxu0 0.0
    %1655 = vmatprep.subr.mxu0 0.0
    %1656 = vmatpush2.msra.mxu0 0.0
    %1657 = vmatprep.subr.mxu0 0.0
    %1658 = vmatpush2.msra.mxu0 0.0
    %1659 = vmatprep.subr.mxu0 0.0
    %1660 = vmatpush2.msra.mxu0 0.0
    %1661 = vmatprep.mubr.f32.mxu0 0.0
    %1662 = vmatmul.mubr.f32.gmra.mxu0 %v1595
    %v1663 = vpop.f32.mrf.mxu0
    %v1664 = vadd.f32 0.0, %v1663
    %v1665 = vpop.f32.mrf.mxu0
    %1666 = vdwg.mxu0
    %v1668 = vrot.slane %v1664, 4
    %v1670 = vadd.f32 %v1155, %v1668
    %v1671 = vxor.u32 %v1670, 2147483648
    %v1672 = vmul.f32 %v1671, 1.442695
    %v1673 = vpow.pop %v1672
    %v1674 = vadd.f32 %v1673, 1.0
    %v1675 = vrcp.pop %v1674
    %v1676 = vmul.f32 1.0, %v1675
    %v1677 = vtanh.pop %v1670
    %v1679 = vrot.slane %v1580, 7
    %v1681 = vmul.f32 %v1676, %v1679
    %1683 = vrot.lane.b32.xlu0 %v1677, 32
    %v1684 = vpop.permute.xlu0 %1683
    %v1686 = vmul.f32 %v1676, %v1684
    %1688 = vrot.lane.b32.xlu0 %v1686, 32
    %v1689 = vpop.permute.xlu0 %1688
    %v1691 = vadd.f32 %v1681, %v1689
    %v1692 = vtanh.pop %v1691
    %1694 = vrot.lane.b32.xlu0 %v1692, 32
    %v1695 = vpop.permute.xlu0 %1694
    %v1697 = vmul.f32 %v1676, %v1695
    %1699 = vrot.lane.b32.xlu0 %v1697, 64
    %v1700 = vpop.permute.xlu0 %1699
    %1702 = vst.msk [vmem:[#allocation2] sm:$0x10] %vm735, %v1700
    %v1703 = vrot.slane %v1697, 4
    %1704 = vrot.lane.b32.xlu0 %v1703, 64
    %v1705 = vpop.permute.xlu0 %1704
    %v1706 = vsel %vm187, %v1705, 0
    %1708 = vmatprep.subr.mxu0 0.0
    %1709 = vmatpush1.msra.mxu0 0.0
    %1710 = vmatprep.subr.mxu0 0.0
    %1711 = vmatpush1.msra.mxu0 0.0
    %1712 = vmatprep.subr.mxu0 0.0
    %1713 = vmatpush1.msra.mxu0 0.0
    %1714 = vmatprep.subr.mxu0 0.0
    %1715 = vmatpush1.msra.mxu0 0.0
    %1716 = vmatprep.subr.mxu0 0.0
    %1717 = vmatpush1.msra.mxu0 0.0
    %1718 = vmatprep.subr.mxu0 0.0
    %1719 = vmatpush1.msra.mxu0 0.0
    %1720 = vmatprep.subr.mxu0 0.0
    %1721 = vmatpush1.msra.mxu0 0.0
    %1722 = vmatprep.subr.mxu0 0.0
    %1723 = vmatpush1.msra.mxu0 0.0
    %1724 = vmatprep.subr.mxu0 0.0
    %1725 = vmatpush1.msra.mxu0 0.0
    %1726 = vmatprep.subr.mxu0 0.0
    %1727 = vmatpush1.msra.mxu0 0.0
    %1728 = vmatprep.subr.mxu0 0.0
    %1729 = vmatpush1.msra.mxu0 0.0
    %1730 = vmatprep.subr.mxu0 0.0
    %1731 = vmatpush1.msra.mxu0 0.0
    %1732 = vmatprep.subr.mxu0 0.0
    %1733 = vmatpush1.msra.mxu0 %v1161
    %1734 = vmatprep.subr.mxu0 0.0
    %1735 = vmatpush1.msra.mxu0 %v1160
    %1736 = vmatprep.subr.mxu0 0.0
    %1737 = vmatpush1.msra.mxu0 %v1159
    %1738 = vmatprep.subr.mxu0 0.0
    %1739 = vmatpush1.msra.mxu0 %v1158
    %1740 = vmatprep.subr.mxu0 0.0
    %1741 = vmatpush2.msra.mxu0 0.0
    %1742 = vmatprep.subr.mxu0 0.0
    %1743 = vmatpush2.msra.mxu0 0.0
    %1744 = vmatprep.subr.mxu0 0.0
    %1745 = vmatpush2.msra.mxu0 0.0
    %1746 = vmatprep.subr.mxu0 0.0
    %1747 = vmatpush2.msra.mxu0 0.0
    %1748 = vmatprep.subr.mxu0 0.0
    %1749 = vmatpush2.msra.mxu0 0.0
    %1750 = vmatprep.subr.mxu0 0.0
    %1751 = vmatpush2.msra.mxu0 0.0
    %1752 = vmatprep.subr.mxu0 0.0
    %1753 = vmatpush2.msra.mxu0 0.0
    %1754 = vmatprep.subr.mxu0 0.0
    %1755 = vmatpush2.msra.mxu0 0.0
    %1756 = vmatprep.subr.mxu0 0.0
    %1757 = vmatpush2.msra.mxu0 0.0
    %1758 = vmatprep.subr.mxu0 0.0
    %1759 = vmatpush2.msra.mxu0 0.0
    %1760 = vmatprep.subr.mxu0 0.0
    %1761 = vmatpush2.msra.mxu0 0.0
    %1762 = vmatprep.subr.mxu0 0.0
    %1763 = vmatpush2.msra.mxu0 0.0
    %1764 = vmatprep.subr.mxu0 0.0
    %1765 = vmatpush2.msra.mxu0 0.0
    %1766 = vmatprep.subr.mxu0 0.0
    %1767 = vmatpush2.msra.mxu0 0.0
    %1768 = vmatprep.subr.mxu0 0.0
    %1769 = vmatpush2.msra.mxu0 0.0
    %1770 = vmatprep.subr.mxu0 0.0
    %1771 = vmatpush2.msra.mxu0 0.0
    %1772 = vmatprep.mubr.f32.mxu0 0.0
    %1773 = vmatmul.mubr.f32.gmra.mxu0 %v1706
    %v1774 = vpop.f32.mrf.mxu0
    %v1775 = vadd.f32 0.0, %v1774
    %v1776 = vpop.f32.mrf.mxu0
    %1777 = vdwg.mxu0
    %v1779 = vrot.slane %v1775, 3
    %v1781 = vadd.f32 %v1155, %v1779
    %v1782 = vxor.u32 %v1781, 2147483648
    %v1783 = vmul.f32 %v1782, 1.442695
    %v1784 = vpow.pop %v1783
    %v1785 = vadd.f32 %v1784, 1.0
    %v1786 = vrcp.pop %v1785
    %v1787 = vmul.f32 1.0, %v1786
    %v1788 = vtanh.pop %v1781
    %v1790 = vrot.slane %v1691, 7
    %v1792 = vmul.f32 %v1787, %v1790
    %1794 = vrot.lane.b32.xlu0 %v1788, 32
    %v1795 = vpop.permute.xlu0 %1794
    %v1797 = vmul.f32 %v1787, %v1795
    %1799 = vrot.lane.b32.xlu0 %v1797, 32
    %v1800 = vpop.permute.xlu0 %1799
    %v1802 = vadd.f32 %v1792, %v1800
    %v1803 = vtanh.pop %v1802
    %1805 = vrot.lane.b32.xlu0 %v1803, 32
    %v1806 = vpop.permute.xlu0 %1805
    %v1808 = vmul.f32 %v1787, %v1806
    %1810 = vrot.lane.b32.xlu0 %v1808, 64
    %v1811 = vpop.permute.xlu0 %1810
    %1813 = vst.msk [vmem:[#allocation2] sm:$0x20] %vm847, %v1811
    %v1814 = vrot.slane %v1808, 5
    %1815 = vrot.lane.b32.xlu0 %v1814, 64
    %v1816 = vpop.permute.xlu0 %1815
    %v1817 = vsel %vm187, %v1816, 0
    %1819 = vmatprep.subr.mxu0 0.0
    %1820 = vmatpush1.msra.mxu0 0.0
    %1821 = vmatprep.subr.mxu0 0.0
    %1822 = vmatpush1.msra.mxu0 0.0
    %1823 = vmatprep.subr.mxu0 0.0
    %1824 = vmatpush1.msra.mxu0 0.0
    %1825 = vmatprep.subr.mxu0 0.0
    %1826 = vmatpush1.msra.mxu0 0.0
    %1827 = vmatprep.subr.mxu0 0.0
    %1828 = vmatpush1.msra.mxu0 0.0
    %1829 = vmatprep.subr.mxu0 0.0
    %1830 = vmatpush1.msra.mxu0 0.0
    %1831 = vmatprep.subr.mxu0 0.0
    %1832 = vmatpush1.msra.mxu0 0.0
    %1833 = vmatprep.subr.mxu0 0.0
    %1834 = vmatpush1.msra.mxu0 0.0
    %1835 = vmatprep.subr.mxu0 0.0
    %1836 = vmatpush1.msra.mxu0 0.0
    %1837 = vmatprep.subr.mxu0 0.0
    %1838 = vmatpush1.msra.mxu0 0.0
    %1839 = vmatprep.subr.mxu0 0.0
    %1840 = vmatpush1.msra.mxu0 0.0
    %1841 = vmatprep.subr.mxu0 0.0
    %1842 = vmatpush1.msra.mxu0 0.0
    %1843 = vmatprep.subr.mxu0 0.0
    %1844 = vmatpush1.msra.mxu0 %v1161
    %1845 = vmatprep.subr.mxu0 0.0
    %1846 = vmatpush1.msra.mxu0 %v1160
    %1847 = vmatprep.subr.mxu0 0.0
    %1848 = vmatpush1.msra.mxu0 %v1159
    %1849 = vmatprep.subr.mxu0 0.0
    %1850 = vmatpush1.msra.mxu0 %v1158
    %1851 = vmatprep.subr.mxu0 0.0
    %1852 = vmatpush2.msra.mxu0 0.0
    %1853 = vmatprep.subr.mxu0 0.0
    %1854 = vmatpush2.msra.mxu0 0.0
    %1855 = vmatprep.subr.mxu0 0.0
    %1856 = vmatpush2.msra.mxu0 0.0
    %1857 = vmatprep.subr.mxu0 0.0
    %1858 = vmatpush2.msra.mxu0 0.0
    %1859 = vmatprep.subr.mxu0 0.0
    %1860 = vmatpush2.msra.mxu0 0.0
    %1861 = vmatprep.subr.mxu0 0.0
    %1862 = vmatpush2.msra.mxu0 0.0
    %1863 = vmatprep.subr.mxu0 0.0
    %1864 = vmatpush2.msra.mxu0 0.0
    %1865 = vmatprep.subr.mxu0 0.0
    %1866 = vmatpush2.msra.mxu0 0.0
    %1867 = vmatprep.subr.mxu0 0.0
    %1868 = vmatpush2.msra.mxu0 0.0
    %1869 = vmatprep.subr.mxu0 0.0
    %1870 = vmatpush2.msra.mxu0 0.0
    %1871 = vmatprep.subr.mxu0 0.0
    %1872 = vmatpush2.msra.mxu0 0.0
    %1873 = vmatprep.subr.mxu0 0.0
    %1874 = vmatpush2.msra.mxu0 0.0
    %1875 = vmatprep.subr.mxu0 0.0
    %1876 = vmatpush2.msra.mxu0 0.0
    %1877 = vmatprep.subr.mxu0 0.0
    %1878 = vmatpush2.msra.mxu0 0.0
    %1879 = vmatprep.subr.mxu0 0.0
    %1880 = vmatpush2.msra.mxu0 0.0
    %1881 = vmatprep.subr.mxu0 0.0
    %1882 = vmatpush2.msra.mxu0 0.0
    %1883 = vmatprep.mubr.f32.mxu0 0.0
    %1884 = vmatmul.mubr.f32.gmra.mxu0 %v1817
    %v1885 = vpop.f32.mrf.mxu0
    %v1886 = vadd.f32 0.0, %v1885
    %v1887 = vpop.f32.mrf.mxu0
    %1888 = vdwg.mxu0
    %v1890 = vrot.slane %v1886, 2
    %v1892 = vadd.f32 %v1155, %v1890
    %v1893 = vxor.u32 %v1892, 2147483648
    %v1894 = vmul.f32 %v1893, 1.442695
    %v1895 = vpow.pop %v1894
    %v1896 = vadd.f32 %v1895, 1.0
    %v1897 = vrcp.pop %v1896
    %v1898 = vmul.f32 1.0, %v1897
    %v1899 = vtanh.pop %v1892
    %v1901 = vrot.slane %v1802, 7
    %v1903 = vmul.f32 %v1898, %v1901
    %1905 = vrot.lane.b32.xlu0 %v1899, 32
    %v1906 = vpop.permute.xlu0 %1905
    %v1908 = vmul.f32 %v1898, %v1906
    %1910 = vrot.lane.b32.xlu0 %v1908, 32
    %v1911 = vpop.permute.xlu0 %1910
    %v1913 = vadd.f32 %v1903, %v1911
    %v1914 = vtanh.pop %v1913
    %1916 = vrot.lane.b32.xlu0 %v1914, 32
    %v1917 = vpop.permute.xlu0 %1916
    %v1919 = vmul.f32 %v1898, %v1917
    %1921 = vrot.lane.b32.xlu0 %v1919, 64
    %v1922 = vpop.permute.xlu0 %1921
    %1924 = vst.msk [vmem:[#allocation2] sm:$0x40] %vm959, %v1922
    %v1925 = vrot.slane %v1919, 6
    %1926 = vrot.lane.b32.xlu0 %v1925, 64
    %v1927 = vpop.permute.xlu0 %1926
    %v1928 = vsel %vm187, %v1927, 0
    %1930 = vmatprep.subr.mxu0 0.0
    %1931 = vmatpush1.msra.mxu0 0.0
    %1932 = vmatprep.subr.mxu0 0.0
    %1933 = vmatpush1.msra.mxu0 0.0
    %1934 = vmatprep.subr.mxu0 0.0
    %1935 = vmatpush1.msra.mxu0 0.0
    %1936 = vmatprep.subr.mxu0 0.0
    %1937 = vmatpush1.msra.mxu0 0.0
    %1938 = vmatprep.subr.mxu0 0.0
    %1939 = vmatpush1.msra.mxu0 0.0
    %1940 = vmatprep.subr.mxu0 0.0
    %1941 = vmatpush1.msra.mxu0 0.0
    %1942 = vmatprep.subr.mxu0 0.0
    %1943 = vmatpush1.msra.mxu0 0.0
    %1944 = vmatprep.subr.mxu0 0.0
    %1945 = vmatpush1.msra.mxu0 0.0
    %1946 = vmatprep.subr.mxu0 0.0
    %1947 = vmatpush1.msra.mxu0 0.0
    %1948 = vmatprep.subr.mxu0 0.0
    %1949 = vmatpush1.msra.mxu0 0.0
    %1950 = vmatprep.subr.mxu0 0.0
    %1951 = vmatpush1.msra.mxu0 0.0
    %1952 = vmatprep.subr.mxu0 0.0
    %1953 = vmatpush1.msra.mxu0 0.0
    %1954 = vmatprep.subr.mxu0 0.0
    %1955 = vmatpush1.msra.mxu0 %v1161
    %1956 = vmatprep.subr.mxu0 0.0
    %1957 = vmatpush1.msra.mxu0 %v1160
    %1958 = vmatprep.subr.mxu0 0.0
    %1959 = vmatpush1.msra.mxu0 %v1159
    %1960 = vmatprep.subr.mxu0 0.0
    %1961 = vmatpush1.msra.mxu0 %v1158
    %1962 = vmatprep.subr.mxu0 0.0
    %1963 = vmatpush2.msra.mxu0 0.0
    %1964 = vmatprep.subr.mxu0 0.0
    %1965 = vmatpush2.msra.mxu0 0.0
    %1966 = vmatprep.subr.mxu0 0.0
    %1967 = vmatpush2.msra.mxu0 0.0
    %1968 = vmatprep.subr.mxu0 0.0
    %1969 = vmatpush2.msra.mxu0 0.0
    %1970 = vmatprep.subr.mxu0 0.0
    %1971 = vmatpush2.msra.mxu0 0.0
    %1972 = vmatprep.subr.mxu0 0.0
    %1973 = vmatpush2.msra.mxu0 0.0
    %1974 = vmatprep.subr.mxu0 0.0
    %1975 = vmatpush2.msra.mxu0 0.0
    %1976 = vmatprep.subr.mxu0 0.0
    %1977 = vmatpush2.msra.mxu0 0.0
    %1978 = vmatprep.subr.mxu0 0.0
    %1979 = vmatpush2.msra.mxu0 0.0
    %1980 = vmatprep.subr.mxu0 0.0
    %1981 = vmatpush2.msra.mxu0 0.0
    %1982 = vmatprep.subr.mxu0 0.0
    %1983 = vmatpush2.msra.mxu0 0.0
    %1984 = vmatprep.subr.mxu0 0.0
    %1985 = vmatpush2.msra.mxu0 0.0
    %1986 = vmatprep.subr.mxu0 0.0
    %1987 = vmatpush2.msra.mxu0 0.0
    %1988 = vmatprep.subr.mxu0 0.0
    %1989 = vmatpush2.msra.mxu0 0.0
    %1990 = vmatprep.subr.mxu0 0.0
    %1991 = vmatpush2.msra.mxu0 0.0
    %1992 = vmatprep.subr.mxu0 0.0
    %1993 = vmatpush2.msra.mxu0 0.0
    %1994 = vmatprep.mubr.f32.mxu0 0.0
    %1995 = vmatmul.mubr.f32.gmra.mxu0 %v1928
    %v1996 = vpop.f32.mrf.mxu0
    %v1997 = vadd.f32 0.0, %v1996
    %v1998 = vpop.f32.mrf.mxu0
    %1999 = vdwg.mxu0
    %v2001 = vrot.slane %v1997, 1
    %v2003 = vadd.f32 %v1155, %v2001
    %v2004 = vxor.u32 %v2003, 2147483648
    %v2005 = vmul.f32 %v2004, 1.442695
    %v2006 = vpow.pop %v2005
    %v2007 = vadd.f32 %v2006, 1.0
    %v2008 = vrcp.pop %v2007
    %v2009 = vmul.f32 1.0, %v2008
    %v2010 = vtanh.pop %v2003
    %v2012 = vrot.slane %v1913, 7
    %v2014 = vmul.f32 %v2009, %v2012
    %2016 = vrot.lane.b32.xlu0 %v2010, 32
    %v2017 = vpop.permute.xlu0 %2016
    %v2019 = vmul.f32 %v2009, %v2017
    %2021 = vrot.lane.b32.xlu0 %v2019, 32
    %v2022 = vpop.permute.xlu0 %2021
    %v2024 = vadd.f32 %v2014, %v2022
    %v2025 = vtanh.pop %v2024
    %2027 = vrot.lane.b32.xlu0 %v2025, 32
    %v2028 = vpop.permute.xlu0 %2027
    %v2030 = vmul.f32 %v2009, %v2028
    %2032 = vrot.lane.b32.xlu0 %v2030, 64
    %v2033 = vpop.permute.xlu0 %2032
    %2035 = vst.msk [vmem:[#allocation2] sm:$0x80] %vm1071, %v2033
    %v2036 = vld [vmem:[#allocation2] sm:$0xff]
    %v2037 = vld [vmem:[%s7] sm:$0xff]
    %v2038 = vld [vmem:[%s7 + $0x8] sm:$0xff]
    %v2039 = vld [vmem:[%s7 + $0x10] sm:$0xff]
    %v2040 = vld [vmem:[%s7 + $0x18] sm:$0xff]
    %v2041 = vld [vmem:[#allocation11] sm:$0x1]
    %v2043 = vlaneseq
    %v2044 = vshrl.u32 %v2043, 7
    %v2045 = vsub.s32 0, %v2044
    %v2046 = vrot.slane %v2041, %v2045
    %v2049 = vsel %vm187, %v2036, 0
    %2051 = vmatprep.subr.mxu0 0.0
    %2052 = vmatpush1.msra.mxu0 0.0
    %2053 = vmatprep.subr.mxu0 0.0
    %2054 = vmatpush1.msra.mxu0 0.0
    %2055 = vmatprep.subr.mxu0 0.0
    %2056 = vmatpush1.msra.mxu0 0.0
    %2057 = vmatprep.subr.mxu0 0.0
    %2058 = vmatpush1.msra.mxu0 0.0
    %2059 = vmatprep.subr.mxu0 0.0
    %2060 = vmatpush1.msra.mxu0 0.0
    %2061 = vmatprep.subr.mxu0 0.0
    %2062 = vmatpush1.msra.mxu0 0.0
    %2063 = vmatprep.subr.mxu0 0.0
    %2064 = vmatpush1.msra.mxu0 0.0
    %2065 = vmatprep.subr.mxu0 0.0
    %2066 = vmatpush1.msra.mxu0 0.0
    %2067 = vmatprep.subr.mxu0 0.0
    %2068 = vmatpush1.msra.mxu0 0.0
    %2069 = vmatprep.subr.mxu0 0.0
    %2070 = vmatpush1.msra.mxu0 0.0
    %2071 = vmatprep.subr.mxu0 0.0
    %2072 = vmatpush1.msra.mxu0 0.0
    %2073 = vmatprep.subr.mxu0 0.0
    %2074 = vmatpush1.msra.mxu0 0.0
    %2075 = vmatprep.subr.mxu0 0.0
    %2076 = vmatpush1.msra.mxu0 %v2040
    %2077 = vmatprep.subr.mxu0 0.0
    %2078 = vmatpush1.msra.mxu0 %v2039
    %2079 = vmatprep.subr.mxu0 0.0
    %2080 = vmatpush1.msra.mxu0 %v2038
    %2081 = vmatprep.subr.mxu0 0.0
    %2082 = vmatpush1.msra.mxu0 %v2037
    %2083 = vmatprep.subr.mxu0 0.0
    %2084 = vmatpush2.msra.mxu0 0.0
    %2085 = vmatprep.subr.mxu0 0.0
    %2086 = vmatpush2.msra.mxu0 0.0
    %2087 = vmatprep.subr.mxu0 0.0
    %2088 = vmatpush2.msra.mxu0 0.0
    %2089 = vmatprep.subr.mxu0 0.0
    %2090 = vmatpush2.msra.mxu0 0.0
    %2091 = vmatprep.subr.mxu0 0.0
    %2092 = vmatpush2.msra.mxu0 0.0
    %2093 = vmatprep.subr.mxu0 0.0
    %2094 = vmatpush2.msra.mxu0 0.0
    %2095 = vmatprep.subr.mxu0 0.0
    %2096 = vmatpush2.msra.mxu0 0.0
    %2097 = vmatprep.subr.mxu0 0.0
    %2098 = vmatpush2.msra.mxu0 0.0
    %2099 = vmatprep.subr.mxu0 0.0
    %2100 = vmatpush2.msra.mxu0 0.0
    %2101 = vmatprep.subr.mxu0 0.0
    %2102 = vmatpush2.msra.mxu0 0.0
    %2103 = vmatprep.subr.mxu0 0.0
    %2104 = vmatpush2.msra.mxu0 0.0
    %2105 = vmatprep.subr.mxu0 0.0
    %2106 = vmatpush2.msra.mxu0 0.0
    %2107 = vmatprep.subr.mxu0 0.0
    %2108 = vmatpush2.msra.mxu0 0.0
    %2109 = vmatprep.subr.mxu0 0.0
    %2110 = vmatpush2.msra.mxu0 0.0
    %2111 = vmatprep.subr.mxu0 0.0
    %2112 = vmatpush2.msra.mxu0 0.0
    %2113 = vmatprep.subr.mxu0 0.0
    %2114 = vmatpush2.msra.mxu0 0.0
    %2115 = vmatprep.mubr.f32.mxu0 0.0
    %2116 = vmatmul.mubr.f32.gmra.mxu0 %v2049
    %v2117 = vpop.f32.mrf.mxu0
    %v2118 = vadd.f32 %v2046, %v2117
    %v2119 = vpop.f32.mrf.mxu0
    %2120 = vdwg.mxu0
    %v2121 = vmax.f32 %v2118, 0.0
    %v2122 = vld [vmem:[%s9] sm:$0x1]
    %v2124 = vlaneseq
    %v2125 = vshrl.u32 %v2124, 7
    %v2126 = vsub.s32 0, %v2125
    %v2127 = vrot.slane %v2122, %v2126
    %v2129 = vmul.f32 %v2121, %v2127
    %vm2130 = vcmask 130048
    %v2131 = vsel %vm2130, %v2129, 0.0
    %2132 = vadd.xlane.f32.xlu0 %v2131
    %v2133 = vpop.xlane.xlu0 %2132
    %v2134 = vld [vmem:[#allocation3] sm:$0x1]
    %v2136 = vlaneseq
    %v2137 = vshrl.u32 %v2136, 7
    %v2138 = vsub.s32 0, %v2137
    %v2139 = vrot.slane %v2134, %v2138
    %v2141 = vadd.f32 %v2133, %v2139
    %vm2142 = vcmask 7168
    %2143 = vst.msk [vmem:[%s11] sm:$0xff] %vm2142, %v2141
    // Predicated region
    $region66: #{simple_lstm_forward.1} parent=1 // pred_check
      _
    $region67: #{simple_lstm_forward.1} parent=1 // pred_check_branch
      %2145 = sbr.rel (0) target = $region69
    $region68: #{simple_lstm_forward.1} parent=1 // pred_region
      _
    $region69: #{simple_lstm_forward.1} parent=1 // pred_fallthru
      _
    // Predicated region
    $region70: #{simple_lstm_forward.1} parent=1 // pred_check
      _
    $region71: #{simple_lstm_forward.1} parent=1 // pred_check_branch
      %2147 = sbr.rel (0) target = $region73
    $region72: #{simple_lstm_forward.1} parent=1 // pred_region
      _
    $region73: #{simple_lstm_forward.1} parent=1 // pred_fallthru
      _
    %2148 = vsyncpa [#allocation5], 1
    %2149 = vsyncpa [#allocation7], 1
    %2150 = vsyncpa [#allocation10], 1

</llo_original>
